<compile_context>
chip_gen: v5e
topology: v5e:2x2
jax: 0.10.0
libtpu: 0.0.40
codegen_flags: <defaults>
</compile_context>

<pallas_src>
import functools

import jax
import jax.numpy as jnp
from jax.experimental import pallas as pl
from jax.experimental.pallas import tpu as pltpu


LANE = 128


def _round_up(x, m):
    return ((x + m - 1) // m) * m


def _vmem_estimate(Tr, *, Wo, Wp, Cin_p, K, Cout_blk, KH, stride, dilation,
                   in_itm, out_itm):
    """Rough per-grid-step VMEM working-set estimate in bytes."""
    Tin = (Tr - 1) * stride + dilation * (KH - 1) + 1
    rows = Tr * Wo
    return (2 * Tin * Wp * Cin_p * in_itm        # double-buffered input rows (+halo)
            + 2 * K * Cout_blk * in_itm          # weight block (2 bufs)
            + 2 * rows * Cout_blk * out_itm      # double-buffered output tile
            + rows * K * in_itm                  # im2col patch scratch
            + 2 * rows * Cout_blk * 4)           # f32 accumulator / epilogue headroom


def _pick_row_tile(Ho, budget, **kw):
    """Largest output-row tile whose working set fits the VMEM budget."""
    for Tr in range(min(Ho, 512), 0, -1):
        if _vmem_estimate(Tr, **kw) <= budget:
            return Tr
    return 1


def _conv2d_im2col_kernel(x_ref, w_ref, b_ref, o_ref, patch_ref,
                          *, KH, KW, stride, dilation, Tr, Wo, patch_gate_axis):
    # x_ref:     (1, Tin, Wp, Cin_p)        padded NHWC input row-block (with halo)
    # w_ref:     (KH*KW*Cin_p, Cout_blk)    weight block
    # b_ref:     (1, Cout_blk)              f32 bias block
    # o_ref:     (1, Tr*Wo, Cout_blk)       lane-dense output tile
    # patch_ref: (Tr*Wo, KH*KW*Cin_p)       persistent VMEM scratch for im2col patch
    Cin_p = x_ref.shape[-1]
    rows = Tr * Wo

    def build_patch():
        # Build the im2col patch: one lane-aligned (multiple-of-128) column block
        # per tap, read straight from the input ref (no full-tile copy).
        if stride != 1:
            # TODO(synk): for stride > 1 the striding is still an in-kernel strided
            # slice of the loaded tile; a wrapper-side space-to-depth would shrink
            # the VMEM tile further.
            x_full = x_ref[0]
        for kh in range(KH):
            for kw in range(KW):
                h0 = kh * dilation
                w0 = kw * dilation
                if stride == 1:
                    sl = x_ref[0, h0:h0 + Tr, w0:w0 + Wo, :]
                else:
                    sl = jax.lax.slice(
                        x_full,
                        (h0, w0, 0),
                        (h0 + stride * (Tr - 1) + 1,
                         w0 + stride * (Wo - 1) + 1, Cin_p),
                        (stride, stride, 1),
                    )
                t = kh * KW + kw
                patch_ref[:, t * Cin_p:(t + 1) * Cin_p] = sl.reshape(rows, Cin_p)

    if patch_gate_axis is None:
        build_patch()
    else:
        # Input block (and therefore the patch) is invariant along this grid axis;
        # the scratch persists across grid steps, so only rebuild at index 0.
        pl.when(pl.program_id(patch_gate_axis) == 0)(build_patch)

    # Single deep-K MXU matmul with f32 accumulation, f32 epilogue (bias add).
    acc = jnp.dot(patch_ref[...], w_ref[...], preferred_element_type=jnp.float32)
    acc = acc + b_ref[...]
    o_ref[0] = acc.astype(o_ref.dtype)


def pallas_conv2d(x_nchw, weight, bias, *, stride=1, padding=0, dilation=1,
                  compute_dtype=None, vmem_budget_bytes=14 * 1024 * 1024):
    """conv2d, NCHW input / (Cout, Cin, KH, KW) weight, groups=1."""
    N, Cin, H, W = x_nchw.shape
    Cout, Cin_w, KH, KW = weight.shape
    assert Cin == Cin_w, "groups != 1 is not supported"
    out_dtype = x_nchw.dtype
    if compute_dtype is None:
        compute_dtype = x_nchw.dtype
    in_itm = jnp.dtype(compute_dtype).itemsize
    out_itm = jnp.dtype(out_dtype).itemsize

    Ho = (H + 2 * padding - dilation * (KH - 1) - 1) // stride + 1
    Wo = (W + 2 * padding - dilation * (KW - 1) - 1) // stride + 1
    Wp = W + 2 * padding

    # Lane-dense channel padding.
    # TODO(synk): for very small Cin the per-tap pad to 128 lanes wastes MXU depth;
    # a compact-K packing (round_up(KH*KW*Cin, 128)) would trade masked patch stores
    # for less matmul work.
    Cin_p = _round_up(Cin, LANE)
    Cout_p = _round_up(Cout, LANE)
    Cout_blk = LANE
    n_cb = Cout_p // Cout_blk
    K = KH * KW * Cin_p

    # Output-row tile sized against a conservative (v7x-safe) VMEM budget.
    Tr = _pick_row_tile(Ho, vmem_budget_bytes, Wo=Wo, Wp=Wp, Cin_p=Cin_p, K=K,
                        Cout_blk=Cout_blk, KH=KH, stride=stride, dilation=dilation,
                        in_itm=in_itm, out_itm=out_itm)
    n_rb = pl.cdiv(Ho, Tr)
    Ho_p = n_rb * Tr
    Tin = (Tr - 1) * stride + dilation * (KH - 1) + 1
    Hin_need = (Ho_p - 1) * stride + dilation * (KH - 1) + 1
    rows = Tr * Wo
    NB = N * n_rb

    # ---- layout glue (stays under the caller's jit) ----
    # NCHW -> NHWC, spatial zero pad (+ extra bottom rows for row-tile padding),
    # channel pad to Cin_p.
    x = jnp.transpose(x_nchw, (0, 2, 3, 1)).astype(compute_dtype)
    pad_h_hi = padding + max(0, Hin_need - (H + 2 * padding))
    x = jnp.pad(x, ((0, 0), (padding, pad_h_hi), (padding, padding), (0, Cin_p - Cin)))

    # Row blocks with duplicated halo rows so plain Blocked indexing works.
    blocks = [
        jax.lax.slice_in_dim(x, rb * Tr * stride, rb * Tr * stride + Tin, axis=1)
        for rb in range(n_rb)
    ]
    x_blocks = jnp.stack(blocks, axis=1).reshape(NB, Tin, Wp, Cin_p)

    # (Cout, Cin, KH, KW) -> (KH*KW*Cin_p, Cout_p), tap-major / Cin-minor ordering
    # to match the im2col patch columns.
    w = jnp.transpose(weight, (2, 3, 1, 0))                       # (KH, KW, Cin, Cout)
    w = jnp.pad(w, ((0, 0), (0, 0), (0, Cin_p - Cin), (0, Cout_p - Cout)))
    w = w.reshape(K, Cout_p).astype(compute_dtype)
    b = jnp.pad(bias.astype(jnp.float32), (0, Cout_p - Cout)).reshape(1, Cout_p)

    # ---- grid ordering: minimize estimated HBM traffic ----
    input_bytes = NB * Tin * Wp * Cin_p * in_itm
    weight_bytes = K * Cout_p * in_itm
    cost_weight_resident = n_cb * input_bytes + weight_bytes   # grid = (cb, i)
    cost_input_resident = input_bytes + NB * weight_bytes      # grid = (i, cb)
    weight_resident = cost_weight_resident <= cost_input_resident

    if weight_resident:
        grid = (n_cb, NB)  # Cout blocks outer -> weight block stays resident
        in_specs = [
            pl.BlockSpec((1, Tin, Wp, Cin_p), lambda cb, i: (i, 0, 0, 0)),
            pl.BlockSpec((K, Cout_blk), lambda cb, i: (0, cb)),
            pl.BlockSpec((1, Cout_blk), lambda cb, i: (0, cb)),
        ]
        out_specs = pl.BlockSpec((1, rows, Cout_blk), lambda cb, i: (i, 0, cb))
        dim_sem = ("parallel", "parallel")
        patch_gate_axis = None          # input changes every step: always rebuild
    else:
        grid = (NB, n_cb)  # input rows outer -> input block stays resident
        in_specs = [
            pl.BlockSpec((1, Tin, Wp, Cin_p), lambda i, cb: (i, 0, 0, 0)),
            pl.BlockSpec((K, Cout_blk), lambda i, cb: (0, cb)),
            pl.BlockSpec((1, Cout_blk), lambda i, cb: (0, cb)),
        ]
        out_specs = pl.BlockSpec((1, rows, Cout_blk), lambda i, cb: (i, 0, cb))
        # cb must iterate sequentially per row-block so the pl.when(cb == 0)
        # patch rebuild happens before the cb > 0 steps.
        dim_sem = ("parallel", "arbitrary")
        patch_gate_axis = 1             # patch invariant along cb: build once per i

    kernel = functools.partial(_conv2d_im2col_kernel, KH=KH, KW=KW, stride=stride,
                               dilation=dilation, Tr=Tr, Wo=Wo,
                               patch_gate_axis=patch_gate_axis)

    est = _vmem_estimate(Tr, Wo=Wo, Wp=Wp, Cin_p=Cin_p, K=K, Cout_blk=Cout_blk,
                         KH=KH, stride=stride, dilation=dilation,
                         in_itm=in_itm, out_itm=out_itm)
    vmem_limit = int(min(48 * 1024 * 1024, max(16 * 1024 * 1024, 2 * est)))

    flops = 2 * N * Ho * Wo * KH * KW * Cin * Cout
    bytes_accessed = (min(cost_weight_resident, cost_input_resident)
                      + b.size * 4
                      + NB * rows * Cout_p * out_itm)

    out = pl.pallas_call(
        kernel,
        out_shape=jax.ShapeDtypeStruct((NB, rows, Cout_p), out_dtype),
        grid_spec=pltpu.PrefetchScalarGridSpec(
            num_scalar_prefetch=0,
            grid=grid,
            in_specs=in_specs,
            out_specs=out_specs,
            scratch_shapes=[pltpu.VMEM((rows, K), compute_dtype)],
        ),
        compiler_params=pltpu.CompilerParams(
            dimension_semantics=dim_sem,
            vmem_limit_bytes=vmem_limit,
        ),
        cost_estimate=pl.CostEstimate(
            flops=flops, transcendentals=0, bytes_accessed=int(bytes_accessed)),
    )(x_blocks, w, b)

    # (NB, Tr*Wo, Cout_p) -> (N, Ho, Wo, Cout) -> NCHW
    out = out.reshape(N, Ho_p, Wo, Cout_p)[:, :Ho, :, :Cout]
    return jnp.transpose(out, (0, 3, 1, 2))


def bayes_gaussion_conv2d_forward(
    x_nchw, weight_mu, weight_rho, bias_mu, bias_rho, key,
    *, stride=1, padding=0, dilation=1, sample_nums=5, scale=1.0,
    compute_dtype=None,
):
    # sample_weight(): mean of `sample_nums` reparameterized draws
    #   mean_i(mu + scale*sigma*eps_i) == mu + scale*sigma * mean_i(eps_i)
    w_sigma = jax.nn.softplus(weight_rho)      # numerically-stable softplus
    b_sigma = jax.nn.softplus(bias_rho)
    k_w, k_b = jax.random.split(key)
    eps_w = jax.random.normal(k_w, (sample_nums,) + weight_mu.shape, jnp.float32)
    eps_b = jax.random.normal(k_b, (sample_nums,) + bias_mu.shape, jnp.float32)
    weight = weight_mu + scale * w_sigma * jnp.mean(eps_w, axis=0)
    bias = bias_mu + scale * b_sigma * jnp.mean(eps_b, axis=0)

    return pallas_conv2d(
        x_nchw, weight, bias,
        stride=stride, padding=padding, dilation=dilation,
        compute_dtype=compute_dtype,
    )


if __name__ == "__main__":
    # small shapes consistent with the module's forward
    N, Cin, H, W = 2, 4, 16, 16
    Cout, KH, KW = 8, 3, 3
    stride, padding, dilation = 1, 1, 1

    root = jax.random.PRNGKey(0)
    k_x, k_wmu, k_wrho, k_bmu, k_brho, k_sample = jax.random.split(root, 6)

    # deterministic parameter init matching reset_parameters():
    #   mu ~ N(0, 0.01), rho ~ N(-4, 0.01)
    x = jax.random.normal(k_x, (N, Cin, H, W), jnp.float32)
    weight_mu = 0.0 + 0.01 * jax.random.normal(k_wmu, (Cout, Cin, KH, KW), jnp.float32)
    weight_rho = -4.0 + 0.01 * jax.random.normal(k_wrho, (Cout, Cin, KH, KW), jnp.float32)
    bias_mu = 0.0 + 0.01 * jax.random.normal(k_bmu, (Cout,), jnp.float32)
    bias_rho = -4.0 + 0.01 * jax.random.normal(k_brho, (Cout,), jnp.float32)

    fwd = jax.jit(functools.partial(
        bayes_gaussion_conv2d_forward,
        stride=stride, padding=padding, dilation=dilation,
        sample_nums=5, scale=1.0,
    ))
    out = fwd(x, weight_mu, weight_rho, bias_mu, bias_rho, k_sample)
    out = jax.block_until_ready(out)
    assert out.shape == (N, Cout, H, W), out.shape

    # reference check against XLA conv with the same sampled weights
    w_sigma = jax.nn.softplus(weight_rho)
    b_sigma = jax.nn.softplus(bias_rho)
    k_w, k_b = jax.random.split(k_sample)
    eps_w = jax.random.normal(k_w, (5,) + weight_mu.shape, jnp.float32)
    eps_b = jax.random.normal(k_b, (5,) + bias_mu.shape, jnp.float32)
    weight = weight_mu + w_sigma * jnp.mean(eps_w, axis=0)
    bias = bias_mu + b_sigma * jnp.mean(eps_b, axis=0)
    ref = jax.lax.conv_general_dilated(
        x, weight,
        window_strides=(stride, stride),
        padding=((padding, padding), (padding, padding)),
        rhs_dilation=(dilation, dilation),
        dimension_numbers=("NCHW", "OIHW", "NCHW"),
    ) + bias[None, :, None, None]
    assert jnp.allclose(out, ref, atol=1e-3, rtol=1e-3)

    print("KERNEL_OK")
</pallas_src>

<mosaic_0001>
module attributes {stable_mosaic.version = 11 : i64} {
  func.func @_conv2d_im2col_kernel(%arg0: i32, %arg1: i32, %arg2: memref<1x18x18x128xf32, #tpu.memory_space<vmem>>, %arg3: memref<1152x128xf32, #tpu.memory_space<vmem>>, %arg4: memref<1x128xf32, #tpu.memory_space<vmem>>, %arg5: memref<1x256x128xf32, #tpu.memory_space<vmem>>, %arg6: memref<256x1152xf32, #tpu.memory_space<vmem>>) attributes {dimension_semantics = [#tpu.dimension_semantics<parallel>, #tpu.dimension_semantics<parallel>], iteration_bounds = array<i64: 1, 2>, scalar_prefetch = 0 : i64, scratch_operands = 1 : i64, tpu.core_type = #tpu.core_type<tc>, window_params = [{transform_indices = @transform_0, window_bounds = array<i64: 1, 18, 18, 128>}, {transform_indices = @transform_1, window_bounds = array<i64: 1152, 128>}, {transform_indices = @transform_2, window_bounds = array<i64: 1, 128>}, {transform_indices = @transform_3, window_bounds = array<i64: 1, 256, 128>}]} {
    %c0 = arith.constant 0 : index
    %c0_0 = arith.constant 0 : index
    %c0_1 = arith.constant 0 : index
    %c0_2 = arith.constant 0 : index
    %0 = vector.load %arg2[%c0, %c0_0, %c0_1, %c0_2] : memref<1x18x18x128xf32, #tpu.memory_space<vmem>>, vector<1x16x16x128xf32>
    %1 = vector.shape_cast %0 : vector<1x16x16x128xf32> to vector<16x16x128xf32>
    %2 = vector.shape_cast %1 : vector<16x16x128xf32> to vector<256x128xf32>
    %c0_3 = arith.constant 0 : index
    %c0_4 = arith.constant 0 : index
    %3 = vector.load %arg6[%c0_3, %c0_4] : memref<256x1152xf32, #tpu.memory_space<vmem>>, vector<256x128xf32>
    tpu.vector_store %arg6[%c0_3, %c0_4], %2 {strides = array<i32>} : memref<256x1152xf32, #tpu.memory_space<vmem>>, vector<256x128xf32>,
    %c0_5 = arith.constant 0 : index
    %c0_6 = arith.constant 0 : index
    %c1 = arith.constant 1 : index
    %c0_7 = arith.constant 0 : index
    %4 = vector.load %arg2[%c0_5, %c0_6, %c1, %c0_7] : memref<1x18x18x128xf32, #tpu.memory_space<vmem>>, vector<1x16x16x128xf32>
    %5 = vector.shape_cast %4 : vector<1x16x16x128xf32> to vector<16x16x128xf32>
    %6 = vector.shape_cast %5 : vector<16x16x128xf32> to vector<256x128xf32>
    %c0_8 = arith.constant 0 : index
    %c128 = arith.constant 128 : index
    %7 = vector.load %arg6[%c0_8, %c128] : memref<256x1152xf32, #tpu.memory_space<vmem>>, vector<256x128xf32>
    tpu.vector_store %arg6[%c0_8, %c128], %6 {strides = array<i32>} : memref<256x1152xf32, #tpu.memory_space<vmem>>, vector<256x128xf32>,
    %c0_9 = arith.constant 0 : index
    %c0_10 = arith.constant 0 : index
    %c2 = arith.constant 2 : index
    %c0_11 = arith.constant 0 : index
    %8 = vector.load %arg2[%c0_9, %c0_10, %c2, %c0_11] : memref<1x18x18x128xf32, #tpu.memory_space<vmem>>, vector<1x16x16x128xf32>
    %9 = vector.shape_cast %8 : vector<1x16x16x128xf32> to vector<16x16x128xf32>
    %10 = vector.shape_cast %9 : vector<16x16x128xf32> to vector<256x128xf32>
    %c0_12 = arith.constant 0 : index
    %c256 = arith.constant 256 : index
    %11 = vector.load %arg6[%c0_12, %c256] : memref<256x1152xf32, #tpu.memory_space<vmem>>, vector<256x128xf32>
    tpu.vector_store %arg6[%c0_12, %c256], %10 {strides = array<i32>} : memref<256x1152xf32, #tpu.memory_space<vmem>>, vector<256x128xf32>,
    %c0_13 = arith.constant 0 : index
    %c1_14 = arith.constant 1 : index
    %c0_15 = arith.constant 0 : index
    %c0_16 = arith.constant 0 : index
    %12 = vector.load %arg2[%c0_13, %c1_14, %c0_15, %c0_16] : memref<1x18x18x128xf32, #tpu.memory_space<vmem>>, vector<1x16x16x128xf32>
    %13 = vector.shape_cast %12 : vector<1x16x16x128xf32> to vector<16x16x128xf32>
    %14 = vector.shape_cast %13 : vector<16x16x128xf32> to vector<256x128xf32>
    %c0_17 = arith.constant 0 : index
    %c384 = arith.constant 384 : index
    %15 = vector.load %arg6[%c0_17, %c384] : memref<256x1152xf32, #tpu.memory_space<vmem>>, vector<256x128xf32>
    tpu.vector_store %arg6[%c0_17, %c384], %14 {strides = array<i32>} : memref<256x1152xf32, #tpu.memory_space<vmem>>, vector<256x128xf32>,
    %c0_18 = arith.constant 0 : index
    %c1_19 = arith.constant 1 : index
    %c1_20 = arith.constant 1 : index
    %c0_21 = arith.constant 0 : index
    %16 = vector.load %arg2[%c0_18, %c1_19, %c1_20, %c0_21] : memref<1x18x18x128xf32, #tpu.memory_space<vmem>>, vector<1x16x16x128xf32>
    %17 = vector.shape_cast %16 : vector<1x16x16x128xf32> to vector<16x16x128xf32>
    %18 = vector.shape_cast %17 : vector<16x16x128xf32> to vector<256x128xf32>
    %c0_22 = arith.constant 0 : index
    %c512 = arith.constant 512 : index
    %19 = vector.load %arg6[%c0_22, %c512] : memref<256x1152xf32, #tpu.memory_space<vmem>>, vector<256x128xf32>
    tpu.vector_store %arg6[%c0_22, %c512], %18 {strides = array<i32>} : memref<256x1152xf32, #tpu.memory_space<vmem>>, vector<256x128xf32>,
    %c0_23 = arith.constant 0 : index
    %c1_24 = arith.constant 1 : index
    %c2_25 = arith.constant 2 : index
    %c0_26 = arith.constant 0 : index
    %20 = vector.load %arg2[%c0_23, %c1_24, %c2_25, %c0_26] : memref<1x18x18x128xf32, #tpu.memory_space<vmem>>, vector<1x16x16x128xf32>
    %21 = vector.shape_cast %20 : vector<1x16x16x128xf32> to vector<16x16x128xf32>
    %22 = vector.shape_cast %21 : vector<16x16x128xf32> to vector<256x128xf32>
    %c0_27 = arith.constant 0 : index
    %c640 = arith.constant 640 : index
    %23 = vector.load %arg6[%c0_27, %c640] : memref<256x1152xf32, #tpu.memory_space<vmem>>, vector<256x128xf32>
    tpu.vector_store %arg6[%c0_27, %c640], %22 {strides = array<i32>} : memref<256x1152xf32, #tpu.memory_space<vmem>>, vector<256x128xf32>,
    %c0_28 = arith.constant 0 : index
    %c2_29 = arith.constant 2 : index
    %c0_30 = arith.constant 0 : index
    %c0_31 = arith.constant 0 : index
    %24 = vector.load %arg2[%c0_28, %c2_29, %c0_30, %c0_31] : memref<1x18x18x128xf32, #tpu.memory_space<vmem>>, vector<1x16x16x128xf32>
    %25 = vector.shape_cast %24 : vector<1x16x16x128xf32> to vector<16x16x128xf32>
    %26 = vector.shape_cast %25 : vector<16x16x128xf32> to vector<256x128xf32>
    %c0_32 = arith.constant 0 : index
    %c768 = arith.constant 768 : index
    %27 = vector.load %arg6[%c0_32, %c768] : memref<256x1152xf32, #tpu.memory_space<vmem>>, vector<256x128xf32>
    tpu.vector_store %arg6[%c0_32, %c768], %26 {strides = array<i32>} : memref<256x1152xf32, #tpu.memory_space<vmem>>, vector<256x128xf32>,
    %c0_33 = arith.constant 0 : index
    %c2_34 = arith.constant 2 : index
    %c1_35 = arith.constant 1 : index
    %c0_36 = arith.constant 0 : index
    %28 = vector.load %arg2[%c0_33, %c2_34, %c1_35, %c0_36] : memref<1x18x18x128xf32, #tpu.memory_space<vmem>>, vector<1x16x16x128xf32>
    %29 = vector.shape_cast %28 : vector<1x16x16x128xf32> to vector<16x16x128xf32>
    %30 = vector.shape_cast %29 : vector<16x16x128xf32> to vector<256x128xf32>
    %c0_37 = arith.constant 0 : index
    %c896 = arith.constant 896 : index
    %31 = vector.load %arg6[%c0_37, %c896] : memref<256x1152xf32, #tpu.memory_space<vmem>>, vector<256x128xf32>
    tpu.vector_store %arg6[%c0_37, %c896], %30 {strides = array<i32>} : memref<256x1152xf32, #tpu.memory_space<vmem>>, vector<256x128xf32>,
    %c0_38 = arith.constant 0 : index
    %c2_39 = arith.constant 2 : index
    %c2_40 = arith.constant 2 : index
    %c0_41 = arith.constant 0 : index
    %32 = vector.load %arg2[%c0_38, %c2_39, %c2_40, %c0_41] : memref<1x18x18x128xf32, #tpu.memory_space<vmem>>, vector<1x16x16x128xf32>
    %33 = vector.shape_cast %32 : vector<1x16x16x128xf32> to vector<16x16x128xf32>
    %34 = vector.shape_cast %33 : vector<16x16x128xf32> to vector<256x128xf32>
    %c0_42 = arith.constant 0 : index
    %c1024 = arith.constant 1024 : index
    %35 = vector.load %arg6[%c0_42, %c1024] : memref<256x1152xf32, #tpu.memory_space<vmem>>, vector<256x128xf32>
    tpu.vector_store %arg6[%c0_42, %c1024], %34 {strides = array<i32>} : memref<256x1152xf32, #tpu.memory_space<vmem>>, vector<256x128xf32>,
    %c0_43 = arith.constant 0 : index
    %c0_44 = arith.constant 0 : index
    %36 = vector.load %arg6[%c0_43, %c0_44] : memref<256x1152xf32, #tpu.memory_space<vmem>>, vector<256x1152xf32>
    %c0_45 = arith.constant 0 : index
    %c0_46 = arith.constant 0 : index
    %37 = vector.load %arg3[%c0_45, %c0_46] : memref<1152x128xf32, #tpu.memory_space<vmem>>, vector<1152x128xf32>
    %cst = arith.constant dense<0.000000e+00> : vector<256x128xf32>
    %38 = tpu.matmul %36, %37, %cst {dimension_numbers = #tpu.dot_dimension_numbers<[1], [0], [0], [1], [0, 0, 1, 1], [], []>} : vector<256x1152xf32>, vector<1152x128xf32>, vector<256x128xf32> -> vector<256x128xf32>
    %c0_47 = arith.constant 0 : index
    %c0_48 = arith.constant 0 : index
    %39 = vector.load %arg4[%c0_47, %c0_48] : memref<1x128xf32, #tpu.memory_space<vmem>>, vector<1x128xf32>
    %40 = vector.broadcast %39 : vector<1x128xf32> to vector<256x128xf32>
    %41 = arith.addf %38, %40 : vector<256x128xf32>
    %c0_49 = arith.constant 0 : index
    %c0_50 = arith.constant 0 : index
    %c0_51 = arith.constant 0 : index
    %42 = vector.load %arg5[%c0_49, %c0_50, %c0_51] : memref<1x256x128xf32, #tpu.memory_space<vmem>>, vector<1x256x128xf32>
    %43 = vector.shape_cast %42 : vector<1x256x128xf32> to vector<256x128xf32>
    %44 = vector.shape_cast %41 : vector<256x128xf32> to vector<1x256x128xf32>
    tpu.vector_store %arg5[%c0_49, %c0_50, %c0_51], %44 {strides = array<i32>} : memref<1x256x128xf32, #tpu.memory_space<vmem>>, vector<1x256x128xf32>,
    return
  }
  func.func @transform_0(%arg0: i32, %arg1: i32) -> (i32, i32, i32, i32) {
    %c0_i32 = arith.constant 0 : i32
    %c0_i32_0 = arith.constant 0 : i32
    %c0_i32_1 = arith.constant 0 : i32
    %c0_i32_2 = arith.constant 0 : i32
    return %arg1, %c0_i32, %c0_i32_0, %c0_i32_1 : i32, i32, i32, i32
  }
  func.func @transform_1(%arg0: i32, %arg1: i32) -> (i32, i32) {
    %c0_i32 = arith.constant 0 : i32
    %c0_i32_0 = arith.constant 0 : i32
    return %c0_i32, %arg0 : i32, i32
  }
  func.func @transform_2(%arg0: i32, %arg1: i32) -> (i32, i32) {
    %c0_i32 = arith.constant 0 : i32
    %c0_i32_0 = arith.constant 0 : i32
    return %c0_i32, %arg0 : i32, i32
  }
  func.func @transform_3(%arg0: i32, %arg1: i32) -> (i32, i32, i32) {
    %c0_i32 = arith.constant 0 : i32
    %c0_i32_0 = arith.constant 0 : i32
    return %arg1, %c0_i32, %arg0 : i32, i32, i32
  }
}

</mosaic_0001>

<llo_original>
// kernel: bayes_gaussion_conv2d_forward.3
$region0: #{bayes_gaussion_conv2d_forward.3}
  #allocation0 [shape = 'u32[]', space=smem, size = 0x4, offset = 0x4, fixed_abs, tag = 'smem constant byte address 0x4 - core index']
  #allocation1 [shape = 'u32[72,128]{1,0:T(1,128)}', space=vmem, size = 0x9000, scoped, tag = 'internal scratch']
  #allocation2 [shape = 'f32[256,1152]{1,0:T(8,128)}', space=vmem, size = 0x120000, scoped, tag = 'scratch operand']
  %s0 = inlined_call_operand.vmem [shape: f32[2,18,18,128], index: 0, kind: input, shape index: {}]
  %s1 = inlined_call_operand.vmem [shape: f32[1152,128], index: 1, kind: input, shape index: {}]
  %s2 = inlined_call_operand.vmem [shape: f32[1,128], index: 2, kind: input, shape index: {}]
  %s3 = inlined_call_operand.vmem [shape: f32[2,256,128], index: 3, kind: output, shape index: {}]
  %s4 = sld [smem:[#allocation0]]
  $region45: #{bayes_gaussion_conv2d_forward.3} parent=0
    _
  %s6 = ssub.s32 1, %s4
  %s7 = scalar_select 0, %s6, %s4
  loop: start=0, step=1, limit=4
  $region2: #{bayes_gaussion_conv2d_forward.3} parent=0 // loop_pre_header
    _
  $region3: #{bayes_gaussion_conv2d_forward.3} parent=0 // loop_header
    %s9 = sphi 0, %s13
    %p10 = scmp.ge.s32.totalorder %s9, 4
    %s16 = sphi 0, %s28
    %s17 = sphi 0, %s24
    %s18 = sphi 0, %s16
    %s19 = sphi 0, %s17
    %s20 = sphi 0, %s18
    %s21 = sphi 0, %s19
    %s31 = sphi 0, %s33
    %s34 = sphi 0, %s31
    %s35 = sphi 0, %s34
    %s51 = sphi 0, %s35
    %s57 = sphi 0, %s59
    %s60 = sphi 0, %s57
    %s61 = sphi 0, %s60
    %s77 = sphi 0, %s61
    %s83 = sphi 0, %s85
    %s86 = sphi 0, %s83
    %s87 = sphi 0, %s86
    %s103 = sphi 0, %s87
    %s111 = sphi 0, %s113
    %s114 = sphi 0, %s111
    %s115 = sphi 0, %s114
    %s131 = sphi 0, %s115
  $region4: #{bayes_gaussion_conv2d_forward.3} parent=0 // loop_header_branch
    %12 = sbr.rel (%p10) target = $region8
  $region5: #{bayes_gaussion_conv2d_forward.3} parent=0 // loop_body
    %s14 = ssub.s32 %s9, 1
    %s15 = ssub.s32 %s9, 2
    %s22 = sadd.s32 1, %s17
    %p23 = scmp.ge.s32.totalorder %s22, 2
    %s24 = scalar_select %p23, 0, %s22
    %s25 = sadd.s32 1, %s16
    %s26 = scalar_select %p23, %s25, %s16
    %p27 = scmp.ge.s32.totalorder %s26, 1
    %s28 = scalar_select %p27, 0, %s26
    %s29 = ssub.s32 %s17, %s24
    %p30 = scmp.eq.s32.totalorder %s29, 0
    %s32 = sadd.s32 %s31, 1
    %s33 = scalar_select %p30, %s31, %s32
    %p36 = pneg %p30
    %p37 = scmp.eq.s32.totalorder %s9, 1
    %p38 = por %p36, %p37
    %p39 = scmp.ne.s32.totalorder %s31, %s34
    %p40 = scmp.eq.s32.totalorder %s9, 0
    %p41 = por %p39, %p40
    %p42 = scmp.ne.s32.totalorder %s31, %s34
    %p43 = scmp.eq.s32.totalorder %s14, 1
    %p44 = por %p42, %p43
    %p45 = scmp.ne.s32.totalorder %s34, %s35
    %p46 = scmp.eq.s32.totalorder %s14, 0
    %p47 = por %p45, %p46
    %p48 = scmp.ne.s32.totalorder %s34, %s35
    %p49 = scmp.eq.s32.totalorder %s15, 1
    %p50 = por %p48, %p49
    %p52 = scmp.ne.s32.totalorder %s35, %s51
    %p53 = scmp.eq.s32.totalorder %s15, 0
    %p54 = por %p52, %p53
    %s55 = ssub.s32 %s16, %s28
    %p56 = scmp.eq.s32.totalorder %s55, 0
    %s58 = sadd.s32 %s57, 1
    %s59 = scalar_select %p56, %s57, %s58
    %p62 = pneg %p56
    %p63 = scmp.eq.s32.totalorder %s9, 1
    %p64 = por %p62, %p63
    %p65 = scmp.ne.s32.totalorder %s57, %s60
    %p66 = scmp.eq.s32.totalorder %s9, 0
    %p67 = por %p65, %p66
    %p68 = scmp.ne.s32.totalorder %s57, %s60
    %p69 = scmp.eq.s32.totalorder %s14, 1
    %p70 = por %p68, %p69
    %p71 = scmp.ne.s32.totalorder %s60, %s61
    %p72 = scmp.eq.s32.totalorder %s14, 0
    %p73 = por %p71, %p72
    %p74 = scmp.ne.s32.totalorder %s60, %s61
    %p75 = scmp.eq.s32.totalorder %s15, 1
    %p76 = por %p74, %p75
    %p78 = scmp.ne.s32.totalorder %s61, %s77
    %p79 = scmp.eq.s32.totalorder %s15, 0
    %p80 = por %p78, %p79
    %s81 = ssub.s32 %s16, %s28
    %p82 = scmp.eq.s32.totalorder %s81, 0
    %s84 = sadd.s32 %s83, 1
    %s85 = scalar_select %p82, %s83, %s84
    %p88 = pneg %p82
    %p89 = scmp.eq.s32.totalorder %s9, 1
    %p90 = por %p88, %p89
    %p91 = scmp.ne.s32.totalorder %s83, %s86
    %p92 = scmp.eq.s32.totalorder %s9, 0
    %p93 = por %p91, %p92
    %p94 = scmp.ne.s32.totalorder %s83, %s86
    %p95 = scmp.eq.s32.totalorder %s14, 1
    %p96 = por %p94, %p95
    %p97 = scmp.ne.s32.totalorder %s86, %s87
    %p98 = scmp.eq.s32.totalorder %s14, 0
    %p99 = por %p97, %p98
    %p100 = scmp.ne.s32.totalorder %s86, %s87
    %p101 = scmp.eq.s32.totalorder %s15, 1
    %p102 = por %p100, %p101
    %p104 = scmp.ne.s32.totalorder %s87, %s103
    %p105 = scmp.eq.s32.totalorder %s15, 0
    %p106 = por %p104, %p105
    %s107 = ssub.s32 %s17, %s24
    %s108 = ssub.s32 %s16, %s28
    %s109 = sor.u32 %s107, %s108
    %p110 = scmp.eq.s32.totalorder %s109, 0
    %s112 = sadd.s32 %s111, 1
    %s113 = scalar_select %p110, %s111, %s112
    %p116 = pneg %p110
    %p117 = scmp.eq.s32.totalorder %s9, 1
    %p118 = por %p116, %p117
    %p119 = scmp.ne.s32.totalorder %s111, %s114
    %p120 = scmp.eq.s32.totalorder %s9, 0
    %p121 = por %p119, %p120
    %p122 = scmp.ne.s32.totalorder %s111, %s114
    %p123 = scmp.eq.s32.totalorder %s14, 1
    %p124 = por %p122, %p123
    %p125 = scmp.ne.s32.totalorder %s114, %s115
    %p126 = scmp.eq.s32.totalorder %s14, 0
    %p127 = por %p125, %p126
    %p128 = scmp.ne.s32.totalorder %s114, %s115
    %p129 = scmp.eq.s32.totalorder %s15, 1
    %p130 = por %p128, %p129
    %p132 = scmp.ne.s32.totalorder %s115, %s131
    %p133 = scmp.eq.s32.totalorder %s15, 0
    %p134 = por %p132, %p133
    %p135 = scmp.le.s32.totalorder 1, %s9
    %p136 = scmp.lt.s32.totalorder %s9, 3
    %p137 = pnand %p135, %p136
    %p138 = pneg %p137
    // Predicated region
    $region9: #{bayes_gaussion_conv2d_forward.3} parent=5 // pred_check
      _
    $region10: #{bayes_gaussion_conv2d_forward.3} parent=5 // pred_check_branch
      %140 = sbr.rel (%p137) target = $region12
    $region11: #{bayes_gaussion_conv2d_forward.3} parent=5 // pred_region
      %s141 = ssub.s32 %s9, 1
      // Predicated region
      $region13: #{bayes_gaussion_conv2d_forward.3} parent=11 // pred_check
        %p142 = pneg %p73
      $region14: #{bayes_gaussion_conv2d_forward.3} parent=11 // pred_check_branch
        %144 = sbr.rel (%p142) target = $region16
      $region15: #{bayes_gaussion_conv2d_forward.3} parent=11 // pred_region
        %p145 = scmp.lt.s32.totalorder %s18, 0
        %s146 = scalar_select %p145, %s18, 0
        %s147 = smul.addr %s146, 8
        %s148 = scalar_lea.vmem %s1, %s147
      $region16: #{bayes_gaussion_conv2d_forward.3} parent=11 // pred_fallthru
        _
      // Predicated region
      $region17: #{bayes_gaussion_conv2d_forward.3} parent=11 // pred_check
        %p149 = pneg %p99
      $region18: #{bayes_gaussion_conv2d_forward.3} parent=11 // pred_check_branch
        %151 = sbr.rel (%p149) target = $region20
      $region19: #{bayes_gaussion_conv2d_forward.3} parent=11 // pred_region
        %p152 = scmp.lt.s32.totalorder %s18, 0
        %s153 = scalar_select %p152, %s18, 0
        %s154 = scalar_lea.vmem %s2, %s153
      $region20: #{bayes_gaussion_conv2d_forward.3} parent=11 // pred_fallthru
        _
    $region12: #{bayes_gaussion_conv2d_forward.3} parent=5 // pred_fallthru
      _
    %p155 = scmp.lt.s32.totalorder %s9, 2
    // Predicated region
    $region21: #{bayes_gaussion_conv2d_forward.3} parent=5 // pred_check
      %p156 = pneg %p155
    $region22: #{bayes_gaussion_conv2d_forward.3} parent=5 // pred_check_branch
      %158 = sbr.rel (%p156) target = $region24
    $region23: #{bayes_gaussion_conv2d_forward.3} parent=5 // pred_region
      // Predicated region
      $region25: #{bayes_gaussion_conv2d_forward.3} parent=23 // pred_check
        %p159 = pneg %p41
      $region26: #{bayes_gaussion_conv2d_forward.3} parent=23 // pred_check_branch
        %161 = sbr.rel (%p159) target = $region28
      $region27: #{bayes_gaussion_conv2d_forward.3} parent=23 // pred_region
        %p162 = scmp.lt.s32.totalorder %s17, 1
        %s163 = scalar_select %p162, %s17, 1
        %s164 = smul.addr %s163, 54
        %s165 = smul.addr %s164, 8
        %s166 = scalar_lea.vmem %s0, %s165
      $region28: #{bayes_gaussion_conv2d_forward.3} parent=23 // pred_fallthru
        _
    $region24: #{bayes_gaussion_conv2d_forward.3} parent=5 // pred_fallthru
      _
    %p167 = scmp.le.s32.totalorder 1, %s9
    %p168 = scmp.lt.s32.totalorder %s9, 3
    %p169 = pnand %p167, %p168
    %p170 = pneg %p169
    // Predicated region
    $region29: #{bayes_gaussion_conv2d_forward.3} parent=5 // pred_check
      _
    $region30: #{bayes_gaussion_conv2d_forward.3} parent=5 // pred_check_branch
      %172 = sbr.rel (%p169) target = $region32
    $region31: #{bayes_gaussion_conv2d_forward.3} parent=5 // pred_region
      %s173 = ssub.s32 %s9, 1
      %p174 = scmp.lt.s32.totalorder %s19, 1
      %s175 = scalar_select %p174, %s19, 1
      %s176 = smul.addr %s175, 54
      %s177 = smul.addr %s176, 8
      %s178 = scalar_lea.vmem %s0, %s177
      %p179 = pneg %p47
      %p180 = pneg %p44
      %p181 = scmp.lt.s32.totalorder %s18, 0
      %s182 = scalar_select %p181, %s18, 0
      %s183 = smul.addr %s182, 8
      %s184 = scalar_lea.vmem %s1, %s183
      %p185 = pneg %p73
      %p186 = pneg %p70
      %p187 = scmp.lt.s32.totalorder %s18, 0
      %s188 = scalar_select %p187, %s18, 0
      %s189 = scalar_lea.vmem %s2, %s188
      %p190 = pneg %p99
      %p191 = pneg %p96
      %p192 = pneg %p127
      %p193 = pneg %p124
      %p194 = scmp.lt.s32.totalorder %s19, 1
      %s195 = scalar_select %p194, %s19, 1
      %p196 = scmp.lt.s32.totalorder %s18, 0
      %s197 = scalar_select %p196, %s18, 0
      %s198 = smul.addr %s195, 32
      %s199 = sadd.s32 %s197, %s198
      %s200 = smul.addr %s199, 8
      %s201 = scalar_lea.vmem %s3, %s200
      %p202 = scmp.lt.s32.totalorder %s19, 1
      %s203 = scalar_select %p202, %s19, 1
      %s204 = smul.addr %s203, 54
      %s205 = smul.addr %s204, 8
      %s206 = scalar_lea.vmem %s0, %s205
      %p207 = scmp.lt.s32.totalorder %s18, 0
      %s208 = scalar_select %p207, %s18, 0
      %s209 = smul.addr %s208, 8
      %s210 = scalar_lea.vmem %s1, %s209
      %p211 = scmp.lt.s32.totalorder %s18, 0
      %s212 = scalar_select %p211, %s18, 0
      %s213 = scalar_lea.vmem %s2, %s212
      %p214 = scmp.lt.s32.totalorder %s19, 1
      %s215 = scalar_select %p214, %s19, 1
      %p216 = scmp.lt.s32.totalorder %s18, 0
      %s217 = scalar_select %p216, %s18, 0
      %s218 = smul.addr %s215, 32
      %s219 = sadd.s32 %s217, %s218
      %s220 = smul.addr %s219, 8
      %s221 = scalar_lea.vmem %s3, %s220
      %v222 = vld [vmem:[%s206] sm:$0xff]
      %v223 = vld [vmem:[%s206 + $0x8] sm:$0xff]
      %v224 = vld [vmem:[%s206 + $0x18] sm:$0xff]
      %v225 = vld [vmem:[%s206 + $0x20] sm:$0xff]
      %v226 = vld [vmem:[%s206 + $0x30] sm:$0xff]
      %v227 = vld [vmem:[%s206 + $0x38] sm:$0xff]
      %v228 = vld [vmem:[%s206 + $0x48] sm:$0xff]
      %v229 = vld [vmem:[%s206 + $0x50] sm:$0xff]
      %v230 = vld [vmem:[%s206 + $0x60] sm:$0xff]
      %v231 = vld [vmem:[%s206 + $0x68] sm:$0xff]
      %v232 = vld [vmem:[%s206 + $0x78] sm:$0xff]
      %v233 = vld [vmem:[%s206 + $0x80] sm:$0xff]
      %v234 = vld [vmem:[%s206 + $0x90] sm:$0xff]
      %v235 = vld [vmem:[%s206 + $0x98] sm:$0xff]
      %v236 = vld [vmem:[%s206 + $0xa8] sm:$0xff]
      %v237 = vld [vmem:[%s206 + $0xb0] sm:$0xff]
      %v238 = vld [vmem:[%s206 + $0xc0] sm:$0xff]
      %v239 = vld [vmem:[%s206 + $0xc8] sm:$0xff]
      %v240 = vld [vmem:[%s206 + $0xd8] sm:$0xff]
      %v241 = vld [vmem:[%s206 + $0xe0] sm:$0xff]
      %v242 = vld [vmem:[%s206 + $0xf0] sm:$0xff]
      %v243 = vld [vmem:[%s206 + $0xf8] sm:$0xff]
      %v244 = vld [vmem:[%s206 + $0x108] sm:$0xff]
      %v245 = vld [vmem:[%s206 + $0x110] sm:$0xff]
      %v246 = vld [vmem:[%s206 + $0x120] sm:$0xff]
      %v247 = vld [vmem:[%s206 + $0x128] sm:$0xff]
      %v248 = vld [vmem:[%s206 + $0x138] sm:$0xff]
      %v249 = vld [vmem:[%s206 + $0x140] sm:$0xff]
      %v250 = vld [vmem:[%s206 + $0x150] sm:$0xff]
      %v251 = vld [vmem:[%s206 + $0x158] sm:$0xff]
      %v252 = vld [vmem:[%s206 + $0x168] sm:$0xff]
      %v253 = vld [vmem:[%s206 + $0x170] sm:$0xff]
      %254 = vst [vmem:[#allocation2] sm:$0xff] %v222
      %255 = vst [vmem:[#allocation2 + $0x48] sm:$0xff] %v223
      %256 = vst [vmem:[#allocation2 + $0x90] sm:$0xff] %v224
      %257 = vst [vmem:[#allocation2 + $0xd8] sm:$0xff] %v225
      %258 = vst [vmem:[#allocation2 + $0x120] sm:$0xff] %v226
      %259 = vst [vmem:[#allocation2 + $0x168] sm:$0xff] %v227
      %260 = vst [vmem:[#allocation2 + $0x1b0] sm:$0xff] %v228
      %261 = vst [vmem:[#allocation2 + $0x1f8] sm:$0xff] %v229
      %262 = vst [vmem:[#allocation2 + $0x240] sm:$0xff] %v230
      %263 = vst [vmem:[#allocation2 + $0x288] sm:$0xff] %v231
      %264 = vst [vmem:[#allocation2 + $0x2d0] sm:$0xff] %v232
      %265 = vst [vmem:[#allocation2 + $0x318] sm:$0xff] %v233
      %266 = vst [vmem:[#allocation2 + $0x360] sm:$0xff] %v234
      %267 = vst [vmem:[#allocation2 + $0x3a8] sm:$0xff] %v235
      %268 = vst [vmem:[#allocation2 + $0x3f0] sm:$0xff] %v236
      %269 = vst [vmem:[#allocation2 + $0x438] sm:$0xff] %v237
      %270 = vst [vmem:[#allocation2 + $0x480] sm:$0xff] %v238
      %271 = vst [vmem:[#allocation2 + $0x4c8] sm:$0xff] %v239
      %272 = vst [vmem:[#allocation2 + $0x510] sm:$0xff] %v240
      %273 = vst [vmem:[#allocation2 + $0x558] sm:$0xff] %v241
      %274 = vst [vmem:[#allocation2 + $0x5a0] sm:$0xff] %v242
      %275 = vst [vmem:[#allocation2 + $0x5e8] sm:$0xff] %v243
      %276 = vst [vmem:[#allocation2 + $0x630] sm:$0xff] %v244
      %277 = vst [vmem:[#allocation2 + $0x678] sm:$0xff] %v245
      %278 = vst [vmem:[#allocation2 + $0x6c0] sm:$0xff] %v246
      %279 = vst [vmem:[#allocation2 + $0x708] sm:$0xff] %v247
      %280 = vst [vmem:[#allocation2 + $0x750] sm:$0xff] %v248
      %281 = vst [vmem:[#allocation2 + $0x798] sm:$0xff] %v249
      %282 = vst [vmem:[#allocation2 + $0x7e0] sm:$0xff] %v250
      %283 = vst [vmem:[#allocation2 + $0x828] sm:$0xff] %v251
      %284 = vst [vmem:[#allocation2 + $0x870] sm:$0xff] %v252
      %285 = vst [vmem:[#allocation2 + $0x8b8] sm:$0xff] %v253
      %v286 = vld [vmem:[%s206 + $0x1] sm:$0xff]
      %v287 = vld [vmem:[%s206 + $0x9] sm:$0xff]
      %v288 = vld [vmem:[%s206 + $0x19] sm:$0xff]
      %v289 = vld [vmem:[%s206 + $0x21] sm:$0xff]
      %v290 = vld [vmem:[%s206 + $0x31] sm:$0xff]
      %v291 = vld [vmem:[%s206 + $0x39] sm:$0xff]
      %v292 = vld [vmem:[%s206 + $0x49] sm:$0xff]
      %v293 = vld [vmem:[%s206 + $0x51] sm:$0xff]
      %v294 = vld [vmem:[%s206 + $0x61] sm:$0xff]
      %v295 = vld [vmem:[%s206 + $0x69] sm:$0xff]
      %v296 = vld [vmem:[%s206 + $0x79] sm:$0xff]
      %v297 = vld [vmem:[%s206 + $0x81] sm:$0xff]
      %v298 = vld [vmem:[%s206 + $0x91] sm:$0xff]
      %v299 = vld [vmem:[%s206 + $0x99] sm:$0xff]
      %v300 = vld [vmem:[%s206 + $0xa9] sm:$0xff]
      %v301 = vld [vmem:[%s206 + $0xb1] sm:$0xff]
      %v302 = vld [vmem:[%s206 + $0xc1] sm:$0xff]
      %v303 = vld [vmem:[%s206 + $0xc9] sm:$0xff]
      %v304 = vld [vmem:[%s206 + $0xd9] sm:$0xff]
      %v305 = vld [vmem:[%s206 + $0xe1] sm:$0xff]
      %v306 = vld [vmem:[%s206 + $0xf1] sm:$0xff]
      %v307 = vld [vmem:[%s206 + $0xf9] sm:$0xff]
      %v308 = vld [vmem:[%s206 + $0x109] sm:$0xff]
      %v309 = vld [vmem:[%s206 + $0x111] sm:$0xff]
      %v310 = vld [vmem:[%s206 + $0x121] sm:$0xff]
      %v311 = vld [vmem:[%s206 + $0x129] sm:$0xff]
      %v312 = vld [vmem:[%s206 + $0x139] sm:$0xff]
      %v313 = vld [vmem:[%s206 + $0x141] sm:$0xff]
      %v314 = vld [vmem:[%s206 + $0x151] sm:$0xff]
      %v315 = vld [vmem:[%s206 + $0x159] sm:$0xff]
      %v316 = vld [vmem:[%s206 + $0x169] sm:$0xff]
      %v317 = vld [vmem:[%s206 + $0x171] sm:$0xff]
      %318 = vst [vmem:[#allocation2 + $0x8] sm:$0xff] %v286
      %319 = vst [vmem:[#allocation2 + $0x50] sm:$0xff] %v287
      %320 = vst [vmem:[#allocation2 + $0x98] sm:$0xff] %v288
      %321 = vst [vmem:[#allocation2 + $0xe0] sm:$0xff] %v289
      %322 = vst [vmem:[#allocation2 + $0x128] sm:$0xff] %v290
      %323 = vst [vmem:[#allocation2 + $0x170] sm:$0xff] %v291
      %324 = vst [vmem:[#allocation2 + $0x1b8] sm:$0xff] %v292
      %325 = vst [vmem:[#allocation2 + $0x200] sm:$0xff] %v293
      %326 = vst [vmem:[#allocation2 + $0x248] sm:$0xff] %v294
      %327 = vst [vmem:[#allocation2 + $0x290] sm:$0xff] %v295
      %328 = vst [vmem:[#allocation2 + $0x2d8] sm:$0xff] %v296
      %329 = vst [vmem:[#allocation2 + $0x320] sm:$0xff] %v297
      %330 = vst [vmem:[#allocation2 + $0x368] sm:$0xff] %v298
      %331 = vst [vmem:[#allocation2 + $0x3b0] sm:$0xff] %v299
      %332 = vst [vmem:[#allocation2 + $0x3f8] sm:$0xff] %v300
      %333 = vst [vmem:[#allocation2 + $0x440] sm:$0xff] %v301
      %334 = vst [vmem:[#allocation2 + $0x488] sm:$0xff] %v302
      %335 = vst [vmem:[#allocation2 + $0x4d0] sm:$0xff] %v303
      %336 = vst [vmem:[#allocation2 + $0x518] sm:$0xff] %v304
      %337 = vst [vmem:[#allocation2 + $0x560] sm:$0xff] %v305
      %338 = vst [vmem:[#allocation2 + $0x5a8] sm:$0xff] %v306
      %339 = vst [vmem:[#allocation2 + $0x5f0] sm:$0xff] %v307
      %340 = vst [vmem:[#allocation2 + $0x638] sm:$0xff] %v308
      %341 = vst [vmem:[#allocation2 + $0x680] sm:$0xff] %v309
      %342 = vst [vmem:[#allocation2 + $0x6c8] sm:$0xff] %v310
      %343 = vst [vmem:[#allocation2 + $0x710] sm:$0xff] %v311
      %344 = vst [vmem:[#allocation2 + $0x758] sm:$0xff] %v312
      %345 = vst [vmem:[#allocation2 + $0x7a0] sm:$0xff] %v313
      %346 = vst [vmem:[#allocation2 + $0x7e8] sm:$0xff] %v314
      %347 = vst [vmem:[#allocation2 + $0x830] sm:$0xff] %v315
      %348 = vst [vmem:[#allocation2 + $0x878] sm:$0xff] %v316
      %349 = vst [vmem:[#allocation2 + $0x8c0] sm:$0xff] %v317
      %v350 = vld [vmem:[%s206 + $0x2] sm:$0xff]
      %v351 = vld [vmem:[%s206 + $0xa] sm:$0xff]
      %v352 = vld [vmem:[%s206 + $0x1a] sm:$0xff]
      %v353 = vld [vmem:[%s206 + $0x22] sm:$0xff]
      %v354 = vld [vmem:[%s206 + $0x32] sm:$0xff]
      %v355 = vld [vmem:[%s206 + $0x3a] sm:$0xff]
      %v356 = vld [vmem:[%s206 + $0x4a] sm:$0xff]
      %v357 = vld [vmem:[%s206 + $0x52] sm:$0xff]
      %v358 = vld [vmem:[%s206 + $0x62] sm:$0xff]
      %v359 = vld [vmem:[%s206 + $0x6a] sm:$0xff]
      %v360 = vld [vmem:[%s206 + $0x7a] sm:$0xff]
      %v361 = vld [vmem:[%s206 + $0x82] sm:$0xff]
      %v362 = vld [vmem:[%s206 + $0x92] sm:$0xff]
      %v363 = vld [vmem:[%s206 + $0x9a] sm:$0xff]
      %v364 = vld [vmem:[%s206 + $0xaa] sm:$0xff]
      %v365 = vld [vmem:[%s206 + $0xb2] sm:$0xff]
      %v366 = vld [vmem:[%s206 + $0xc2] sm:$0xff]
      %v367 = vld [vmem:[%s206 + $0xca] sm:$0xff]
      %v368 = vld [vmem:[%s206 + $0xda] sm:$0xff]
      %v369 = vld [vmem:[%s206 + $0xe2] sm:$0xff]
      %v370 = vld [vmem:[%s206 + $0xf2] sm:$0xff]
      %v371 = vld [vmem:[%s206 + $0xfa] sm:$0xff]
      %v372 = vld [vmem:[%s206 + $0x10a] sm:$0xff]
      %v373 = vld [vmem:[%s206 + $0x112] sm:$0xff]
      %v374 = vld [vmem:[%s206 + $0x122] sm:$0xff]
      %v375 = vld [vmem:[%s206 + $0x12a] sm:$0xff]
      %v376 = vld [vmem:[%s206 + $0x13a] sm:$0xff]
      %v377 = vld [vmem:[%s206 + $0x142] sm:$0xff]
      %v378 = vld [vmem:[%s206 + $0x152] sm:$0xff]
      %v379 = vld [vmem:[%s206 + $0x15a] sm:$0xff]
      %v380 = vld [vmem:[%s206 + $0x16a] sm:$0xff]
      %v381 = vld [vmem:[%s206 + $0x172] sm:$0xff]
      %382 = vst [vmem:[#allocation2 + $0x10] sm:$0xff] %v350
      %383 = vst [vmem:[#allocation2 + $0x58] sm:$0xff] %v351
      %384 = vst [vmem:[#allocation2 + $0xa0] sm:$0xff] %v352
      %385 = vst [vmem:[#allocation2 + $0xe8] sm:$0xff] %v353
      %386 = vst [vmem:[#allocation2 + $0x130] sm:$0xff] %v354
      %387 = vst [vmem:[#allocation2 + $0x178] sm:$0xff] %v355
      %388 = vst [vmem:[#allocation2 + $0x1c0] sm:$0xff] %v356
      %389 = vst [vmem:[#allocation2 + $0x208] sm:$0xff] %v357
      %390 = vst [vmem:[#allocation2 + $0x250] sm:$0xff] %v358
      %391 = vst [vmem:[#allocation2 + $0x298] sm:$0xff] %v359
      %392 = vst [vmem:[#allocation2 + $0x2e0] sm:$0xff] %v360
      %393 = vst [vmem:[#allocation2 + $0x328] sm:$0xff] %v361
      %394 = vst [vmem:[#allocation2 + $0x370] sm:$0xff] %v362
      %395 = vst [vmem:[#allocation2 + $0x3b8] sm:$0xff] %v363
      %396 = vst [vmem:[#allocation2 + $0x400] sm:$0xff] %v364
      %397 = vst [vmem:[#allocation2 + $0x448] sm:$0xff] %v365
      %398 = vst [vmem:[#allocation2 + $0x490] sm:$0xff] %v366
      %399 = vst [vmem:[#allocation2 + $0x4d8] sm:$0xff] %v367
      %400 = vst [vmem:[#allocation2 + $0x520] sm:$0xff] %v368
      %401 = vst [vmem:[#allocation2 + $0x568] sm:$0xff] %v369
      %402 = vst [vmem:[#allocation2 + $0x5b0] sm:$0xff] %v370
      %403 = vst [vmem:[#allocation2 + $0x5f8] sm:$0xff] %v371
      %404 = vst [vmem:[#allocation2 + $0x640] sm:$0xff] %v372
      %405 = vst [vmem:[#allocation2 + $0x688] sm:$0xff] %v373
      %406 = vst [vmem:[#allocation2 + $0x6d0] sm:$0xff] %v374
      %407 = vst [vmem:[#allocation2 + $0x718] sm:$0xff] %v375
      %408 = vst [vmem:[#allocation2 + $0x760] sm:$0xff] %v376
      %409 = vst [vmem:[#allocation2 + $0x7a8] sm:$0xff] %v377
      %410 = vst [vmem:[#allocation2 + $0x7f0] sm:$0xff] %v378
      %411 = vst [vmem:[#allocation2 + $0x838] sm:$0xff] %v379
      %412 = vst [vmem:[#allocation2 + $0x880] sm:$0xff] %v380
      %413 = vst [vmem:[#allocation2 + $0x8c8] sm:$0xff] %v381
      %s414 = scalar_lea.vmem %s206, 24
      %v415 = vld [vmem:[%s414] sm:$0xff]
      %v416 = vld [vmem:[%s414 + $0x8] sm:$0xff]
      %v417 = vld [vmem:[%s414 + $0x18] sm:$0xff]
      %v418 = vld [vmem:[%s414 + $0x20] sm:$0xff]
      %v419 = vld [vmem:[%s414 + $0x30] sm:$0xff]
      %v420 = vld [vmem:[%s414 + $0x38] sm:$0xff]
      %v421 = vld [vmem:[%s414 + $0x48] sm:$0xff]
      %v422 = vld [vmem:[%s414 + $0x50] sm:$0xff]
      %v423 = vld [vmem:[%s414 + $0x60] sm:$0xff]
      %v424 = vld [vmem:[%s414 + $0x68] sm:$0xff]
      %v425 = vld [vmem:[%s414 + $0x78] sm:$0xff]
      %v426 = vld [vmem:[%s414 + $0x80] sm:$0xff]
      %v427 = vld [vmem:[%s414 + $0x90] sm:$0xff]
      %v428 = vld [vmem:[%s414 + $0x98] sm:$0xff]
      %v429 = vld [vmem:[%s414 + $0xa8] sm:$0xff]
      %v430 = vld [vmem:[%s414 + $0xb0] sm:$0xff]
      %v431 = vld [vmem:[%s414 + $0xc0] sm:$0xff]
      %v432 = vld [vmem:[%s414 + $0xc8] sm:$0xff]
      %v433 = vld [vmem:[%s414 + $0xd8] sm:$0xff]
      %v434 = vld [vmem:[%s414 + $0xe0] sm:$0xff]
      %v435 = vld [vmem:[%s414 + $0xf0] sm:$0xff]
      %v436 = vld [vmem:[%s414 + $0xf8] sm:$0xff]
      %v437 = vld [vmem:[%s414 + $0x108] sm:$0xff]
      %v438 = vld [vmem:[%s414 + $0x110] sm:$0xff]
      %v439 = vld [vmem:[%s414 + $0x120] sm:$0xff]
      %v440 = vld [vmem:[%s414 + $0x128] sm:$0xff]
      %v441 = vld [vmem:[%s414 + $0x138] sm:$0xff]
      %v442 = vld [vmem:[%s414 + $0x140] sm:$0xff]
      %v443 = vld [vmem:[%s414 + $0x150] sm:$0xff]
      %v444 = vld [vmem:[%s414 + $0x158] sm:$0xff]
      %v445 = vld [vmem:[%s414 + $0x168] sm:$0xff]
      %v446 = vld [vmem:[%s414 + $0x170] sm:$0xff]
      %447 = vst [vmem:[#allocation2 + $0x18] sm:$0xff] %v415
      %448 = vst [vmem:[#allocation2 + $0x60] sm:$0xff] %v416
      %449 = vst [vmem:[#allocation2 + $0xa8] sm:$0xff] %v417
      %450 = vst [vmem:[#allocation2 + $0xf0] sm:$0xff] %v418
      %451 = vst [vmem:[#allocation2 + $0x138] sm:$0xff] %v419
      %452 = vst [vmem:[#allocation2 + $0x180] sm:$0xff] %v420
      %453 = vst [vmem:[#allocation2 + $0x1c8] sm:$0xff] %v421
      %454 = vst [vmem:[#allocation2 + $0x210] sm:$0xff] %v422
      %455 = vst [vmem:[#allocation2 + $0x258] sm:$0xff] %v423
      %456 = vst [vmem:[#allocation2 + $0x2a0] sm:$0xff] %v424
      %457 = vst [vmem:[#allocation2 + $0x2e8] sm:$0xff] %v425
      %458 = vst [vmem:[#allocation2 + $0x330] sm:$0xff] %v426
      %459 = vst [vmem:[#allocation2 + $0x378] sm:$0xff] %v427
      %460 = vst [vmem:[#allocation2 + $0x3c0] sm:$0xff] %v428
      %461 = vst [vmem:[#allocation2 + $0x408] sm:$0xff] %v429
      %462 = vst [vmem:[#allocation2 + $0x450] sm:$0xff] %v430
      %463 = vst [vmem:[#allocation2 + $0x498] sm:$0xff] %v431
      %464 = vst [vmem:[#allocation2 + $0x4e0] sm:$0xff] %v432
      %465 = vst [vmem:[#allocation2 + $0x528] sm:$0xff] %v433
      %466 = vst [vmem:[#allocation2 + $0x570] sm:$0xff] %v434
      %467 = vst [vmem:[#allocation2 + $0x5b8] sm:$0xff] %v435
      %468 = vst [vmem:[#allocation2 + $0x600] sm:$0xff] %v436
      %469 = vst [vmem:[#allocation2 + $0x648] sm:$0xff] %v437
      %470 = vst [vmem:[#allocation2 + $0x690] sm:$0xff] %v438
      %471 = vst [vmem:[#allocation2 + $0x6d8] sm:$0xff] %v439
      %472 = vst [vmem:[#allocation2 + $0x720] sm:$0xff] %v440
      %473 = vst [vmem:[#allocation2 + $0x768] sm:$0xff] %v441
      %474 = vst [vmem:[#allocation2 + $0x7b0] sm:$0xff] %v442
      %475 = vst [vmem:[#allocation2 + $0x7f8] sm:$0xff] %v443
      %476 = vst [vmem:[#allocation2 + $0x840] sm:$0xff] %v444
      %477 = vst [vmem:[#allocation2 + $0x888] sm:$0xff] %v445
      %478 = vst [vmem:[#allocation2 + $0x8d0] sm:$0xff] %v446
      %v479 = vld [vmem:[%s414 + $0x1] sm:$0xff]
      %v480 = vld [vmem:[%s414 + $0x9] sm:$0xff]
      %v481 = vld [vmem:[%s414 + $0x19] sm:$0xff]
      %v482 = vld [vmem:[%s414 + $0x21] sm:$0xff]
      %v483 = vld [vmem:[%s414 + $0x31] sm:$0xff]
      %v484 = vld [vmem:[%s414 + $0x39] sm:$0xff]
      %v485 = vld [vmem:[%s414 + $0x49] sm:$0xff]
      %v486 = vld [vmem:[%s414 + $0x51] sm:$0xff]
      %v487 = vld [vmem:[%s414 + $0x61] sm:$0xff]
      %v488 = vld [vmem:[%s414 + $0x69] sm:$0xff]
      %v489 = vld [vmem:[%s414 + $0x79] sm:$0xff]
      %v490 = vld [vmem:[%s414 + $0x81] sm:$0xff]
      %v491 = vld [vmem:[%s414 + $0x91] sm:$0xff]
      %v492 = vld [vmem:[%s414 + $0x99] sm:$0xff]
      %v493 = vld [vmem:[%s414 + $0xa9] sm:$0xff]
      %v494 = vld [vmem:[%s414 + $0xb1] sm:$0xff]
      %v495 = vld [vmem:[%s414 + $0xc1] sm:$0xff]
      %v496 = vld [vmem:[%s414 + $0xc9] sm:$0xff]
      %v497 = vld [vmem:[%s414 + $0xd9] sm:$0xff]
      %v498 = vld [vmem:[%s414 + $0xe1] sm:$0xff]
      %v499 = vld [vmem:[%s414 + $0xf1] sm:$0xff]
      %v500 = vld [vmem:[%s414 + $0xf9] sm:$0xff]
      %v501 = vld [vmem:[%s414 + $0x109] sm:$0xff]
      %v502 = vld [vmem:[%s414 + $0x111] sm:$0xff]
      %v503 = vld [vmem:[%s414 + $0x121] sm:$0xff]
      %v504 = vld [vmem:[%s414 + $0x129] sm:$0xff]
      %v505 = vld [vmem:[%s414 + $0x139] sm:$0xff]
      %v506 = vld [vmem:[%s414 + $0x141] sm:$0xff]
      %v507 = vld [vmem:[%s414 + $0x151] sm:$0xff]
      %v508 = vld [vmem:[%s414 + $0x159] sm:$0xff]
      %v509 = vld [vmem:[%s414 + $0x169] sm:$0xff]
      %v510 = vld [vmem:[%s414 + $0x171] sm:$0xff]
      %511 = vst [vmem:[#allocation2 + $0x20] sm:$0xff] %v479
      %512 = vst [vmem:[#allocation2 + $0x68] sm:$0xff] %v480
      %513 = vst [vmem:[#allocation2 + $0xb0] sm:$0xff] %v481
      %514 = vst [vmem:[#allocation2 + $0xf8] sm:$0xff] %v482
      %515 = vst [vmem:[#allocation2 + $0x140] sm:$0xff] %v483
      %516 = vst [vmem:[#allocation2 + $0x188] sm:$0xff] %v484
      %517 = vst [vmem:[#allocation2 + $0x1d0] sm:$0xff] %v485
      %518 = vst [vmem:[#allocation2 + $0x218] sm:$0xff] %v486
      %519 = vst [vmem:[#allocation2 + $0x260] sm:$0xff] %v487
      %520 = vst [vmem:[#allocation2 + $0x2a8] sm:$0xff] %v488
      %521 = vst [vmem:[#allocation2 + $0x2f0] sm:$0xff] %v489
      %522 = vst [vmem:[#allocation2 + $0x338] sm:$0xff] %v490
      %523 = vst [vmem:[#allocation2 + $0x380] sm:$0xff] %v491
      %524 = vst [vmem:[#allocation2 + $0x3c8] sm:$0xff] %v492
      %525 = vst [vmem:[#allocation2 + $0x410] sm:$0xff] %v493
      %526 = vst [vmem:[#allocation2 + $0x458] sm:$0xff] %v494
      %527 = vst [vmem:[#allocation2 + $0x4a0] sm:$0xff] %v495
      %528 = vst [vmem:[#allocation2 + $0x4e8] sm:$0xff] %v496
      %529 = vst [vmem:[#allocation2 + $0x530] sm:$0xff] %v497
      %530 = vst [vmem:[#allocation2 + $0x578] sm:$0xff] %v498
      %531 = vst [vmem:[#allocation2 + $0x5c0] sm:$0xff] %v499
      %532 = vst [vmem:[#allocation2 + $0x608] sm:$0xff] %v500
      %533 = vst [vmem:[#allocation2 + $0x650] sm:$0xff] %v501
      %534 = vst [vmem:[#allocation2 + $0x698] sm:$0xff] %v502
      %535 = vst [vmem:[#allocation2 + $0x6e0] sm:$0xff] %v503
      %536 = vst [vmem:[#allocation2 + $0x728] sm:$0xff] %v504
      %537 = vst [vmem:[#allocation2 + $0x770] sm:$0xff] %v505
      %538 = vst [vmem:[#allocation2 + $0x7b8] sm:$0xff] %v506
      %539 = vst [vmem:[#allocation2 + $0x800] sm:$0xff] %v507
      %540 = vst [vmem:[#allocation2 + $0x848] sm:$0xff] %v508
      %541 = vst [vmem:[#allocation2 + $0x890] sm:$0xff] %v509
      %542 = vst [vmem:[#allocation2 + $0x8d8] sm:$0xff] %v510
      %v543 = vld [vmem:[%s414 + $0x2] sm:$0xff]
      %v544 = vld [vmem:[%s414 + $0xa] sm:$0xff]
      %v545 = vld [vmem:[%s414 + $0x1a] sm:$0xff]
      %v546 = vld [vmem:[%s414 + $0x22] sm:$0xff]
      %v547 = vld [vmem:[%s414 + $0x32] sm:$0xff]
      %v548 = vld [vmem:[%s414 + $0x3a] sm:$0xff]
      %v549 = vld [vmem:[%s414 + $0x4a] sm:$0xff]
      %v550 = vld [vmem:[%s414 + $0x52] sm:$0xff]
      %v551 = vld [vmem:[%s414 + $0x62] sm:$0xff]
      %v552 = vld [vmem:[%s414 + $0x6a] sm:$0xff]
      %v553 = vld [vmem:[%s414 + $0x7a] sm:$0xff]
      %v554 = vld [vmem:[%s414 + $0x82] sm:$0xff]
      %v555 = vld [vmem:[%s414 + $0x92] sm:$0xff]
      %v556 = vld [vmem:[%s414 + $0x9a] sm:$0xff]
      %v557 = vld [vmem:[%s414 + $0xaa] sm:$0xff]
      %v558 = vld [vmem:[%s414 + $0xb2] sm:$0xff]
      %v559 = vld [vmem:[%s414 + $0xc2] sm:$0xff]
      %v560 = vld [vmem:[%s414 + $0xca] sm:$0xff]
      %v561 = vld [vmem:[%s414 + $0xda] sm:$0xff]
      %v562 = vld [vmem:[%s414 + $0xe2] sm:$0xff]
      %v563 = vld [vmem:[%s414 + $0xf2] sm:$0xff]
      %v564 = vld [vmem:[%s414 + $0xfa] sm:$0xff]
      %v565 = vld [vmem:[%s414 + $0x10a] sm:$0xff]
      %v566 = vld [vmem:[%s414 + $0x112] sm:$0xff]
      %v567 = vld [vmem:[%s414 + $0x122] sm:$0xff]
      %v568 = vld [vmem:[%s414 + $0x12a] sm:$0xff]
      %v569 = vld [vmem:[%s414 + $0x13a] sm:$0xff]
      %v570 = vld [vmem:[%s414 + $0x142] sm:$0xff]
      %v571 = vld [vmem:[%s414 + $0x152] sm:$0xff]
      %v572 = vld [vmem:[%s414 + $0x15a] sm:$0xff]
      %v573 = vld [vmem:[%s414 + $0x16a] sm:$0xff]
      %v574 = vld [vmem:[%s414 + $0x172] sm:$0xff]
      %575 = vst [vmem:[#allocation2 + $0x28] sm:$0xff] %v543
      %576 = vst [vmem:[#allocation2 + $0x70] sm:$0xff] %v544
      %577 = vst [vmem:[#allocation2 + $0xb8] sm:$0xff] %v545
      %578 = vst [vmem:[#allocation2 + $0x100] sm:$0xff] %v546
      %579 = vst [vmem:[#allocation2 + $0x148] sm:$0xff] %v547
      %580 = vst [vmem:[#allocation2 + $0x190] sm:$0xff] %v548
      %581 = vst [vmem:[#allocation2 + $0x1d8] sm:$0xff] %v549
      %582 = vst [vmem:[#allocation2 + $0x220] sm:$0xff] %v550
      %583 = vst [vmem:[#allocation2 + $0x268] sm:$0xff] %v551
      %584 = vst [vmem:[#allocation2 + $0x2b0] sm:$0xff] %v552
      %585 = vst [vmem:[#allocation2 + $0x2f8] sm:$0xff] %v553
      %586 = vst [vmem:[#allocation2 + $0x340] sm:$0xff] %v554
      %587 = vst [vmem:[#allocation2 + $0x388] sm:$0xff] %v555
      %588 = vst [vmem:[#allocation2 + $0x3d0] sm:$0xff] %v556
      %589 = vst [vmem:[#allocation2 + $0x418] sm:$0xff] %v557
      %590 = vst [vmem:[#allocation2 + $0x460] sm:$0xff] %v558
      %591 = vst [vmem:[#allocation2 + $0x4a8] sm:$0xff] %v559
      %592 = vst [vmem:[#allocation2 + $0x4f0] sm:$0xff] %v560
      %593 = vst [vmem:[#allocation2 + $0x538] sm:$0xff] %v561
      %594 = vst [vmem:[#allocation2 + $0x580] sm:$0xff] %v562
      %595 = vst [vmem:[#allocation2 + $0x5c8] sm:$0xff] %v563
      %596 = vst [vmem:[#allocation2 + $0x610] sm:$0xff] %v564
      %597 = vst [vmem:[#allocation2 + $0x658] sm:$0xff] %v565
      %598 = vst [vmem:[#allocation2 + $0x6a0] sm:$0xff] %v566
      %599 = vst [vmem:[#allocation2 + $0x6e8] sm:$0xff] %v567
      %600 = vst [vmem:[#allocation2 + $0x730] sm:$0xff] %v568
      %601 = vst [vmem:[#allocation2 + $0x778] sm:$0xff] %v569
      %602 = vst [vmem:[#allocation2 + $0x7c0] sm:$0xff] %v570
      %603 = vst [vmem:[#allocation2 + $0x808] sm:$0xff] %v571
      %604 = vst [vmem:[#allocation2 + $0x850] sm:$0xff] %v572
      %605 = vst [vmem:[#allocation2 + $0x898] sm:$0xff] %v573
      %606 = vst [vmem:[#allocation2 + $0x8e0] sm:$0xff] %v574
      %s607 = scalar_lea.vmem %s206, 48
      %v608 = vld [vmem:[%s607] sm:$0xff]
      %v609 = vld [vmem:[%s607 + $0x8] sm:$0xff]
      %v610 = vld [vmem:[%s607 + $0x18] sm:$0xff]
      %v611 = vld [vmem:[%s607 + $0x20] sm:$0xff]
      %v612 = vld [vmem:[%s607 + $0x30] sm:$0xff]
      %v613 = vld [vmem:[%s607 + $0x38] sm:$0xff]
      %v614 = vld [vmem:[%s607 + $0x48] sm:$0xff]
      %v615 = vld [vmem:[%s607 + $0x50] sm:$0xff]
      %v616 = vld [vmem:[%s607 + $0x60] sm:$0xff]
      %v617 = vld [vmem:[%s607 + $0x68] sm:$0xff]
      %v618 = vld [vmem:[%s607 + $0x78] sm:$0xff]
      %v619 = vld [vmem:[%s607 + $0x80] sm:$0xff]
      %v620 = vld [vmem:[%s607 + $0x90] sm:$0xff]
      %v621 = vld [vmem:[%s607 + $0x98] sm:$0xff]
      %v622 = vld [vmem:[%s607 + $0xa8] sm:$0xff]
      %v623 = vld [vmem:[%s607 + $0xb0] sm:$0xff]
      %v624 = vld [vmem:[%s607 + $0xc0] sm:$0xff]
      %v625 = vld [vmem:[%s607 + $0xc8] sm:$0xff]
      %v626 = vld [vmem:[%s607 + $0xd8] sm:$0xff]
      %v627 = vld [vmem:[%s607 + $0xe0] sm:$0xff]
      %v628 = vld [vmem:[%s607 + $0xf0] sm:$0xff]
      %v629 = vld [vmem:[%s607 + $0xf8] sm:$0xff]
      %v630 = vld [vmem:[%s607 + $0x108] sm:$0xff]
      %v631 = vld [vmem:[%s607 + $0x110] sm:$0xff]
      %v632 = vld [vmem:[%s607 + $0x120] sm:$0xff]
      %v633 = vld [vmem:[%s607 + $0x128] sm:$0xff]
      %v634 = vld [vmem:[%s607 + $0x138] sm:$0xff]
      %v635 = vld [vmem:[%s607 + $0x140] sm:$0xff]
      %v636 = vld [vmem:[%s607 + $0x150] sm:$0xff]
      %v637 = vld [vmem:[%s607 + $0x158] sm:$0xff]
      %v638 = vld [vmem:[%s607 + $0x168] sm:$0xff]
      %v639 = vld [vmem:[%s607 + $0x170] sm:$0xff]
      %640 = vst [vmem:[#allocation2 + $0x30] sm:$0xff] %v608
      %641 = vst [vmem:[#allocation2 + $0x78] sm:$0xff] %v609
      %642 = vst [vmem:[#allocation2 + $0xc0] sm:$0xff] %v610
      %643 = vst [vmem:[#allocation2 + $0x108] sm:$0xff] %v611
      %644 = vst [vmem:[#allocation2 + $0x150] sm:$0xff] %v612
      %645 = vst [vmem:[#allocation2 + $0x198] sm:$0xff] %v613
      %646 = vst [vmem:[#allocation2 + $0x1e0] sm:$0xff] %v614
      %647 = vst [vmem:[#allocation2 + $0x228] sm:$0xff] %v615
      %648 = vst [vmem:[#allocation2 + $0x270] sm:$0xff] %v616
      %649 = vst [vmem:[#allocation2 + $0x2b8] sm:$0xff] %v617
      %650 = vst [vmem:[#allocation2 + $0x300] sm:$0xff] %v618
      %651 = vst [vmem:[#allocation2 + $0x348] sm:$0xff] %v619
      %652 = vst [vmem:[#allocation2 + $0x390] sm:$0xff] %v620
      %653 = vst [vmem:[#allocation2 + $0x3d8] sm:$0xff] %v621
      %654 = vst [vmem:[#allocation2 + $0x420] sm:$0xff] %v622
      %655 = vst [vmem:[#allocation2 + $0x468] sm:$0xff] %v623
      %656 = vst [vmem:[#allocation2 + $0x4b0] sm:$0xff] %v624
      %657 = vst [vmem:[#allocation2 + $0x4f8] sm:$0xff] %v625
      %658 = vst [vmem:[#allocation2 + $0x540] sm:$0xff] %v626
      %659 = vst [vmem:[#allocation2 + $0x588] sm:$0xff] %v627
      %660 = vst [vmem:[#allocation2 + $0x5d0] sm:$0xff] %v628
      %661 = vst [vmem:[#allocation2 + $0x618] sm:$0xff] %v629
      %662 = vst [vmem:[#allocation2 + $0x660] sm:$0xff] %v630
      %663 = vst [vmem:[#allocation2 + $0x6a8] sm:$0xff] %v631
      %664 = vst [vmem:[#allocation2 + $0x6f0] sm:$0xff] %v632
      %665 = vst [vmem:[#allocation2 + $0x738] sm:$0xff] %v633
      %666 = vst [vmem:[#allocation2 + $0x780] sm:$0xff] %v634
      %667 = vst [vmem:[#allocation2 + $0x7c8] sm:$0xff] %v635
      %668 = vst [vmem:[#allocation2 + $0x810] sm:$0xff] %v636
      %669 = vst [vmem:[#allocation2 + $0x858] sm:$0xff] %v637
      %670 = vst [vmem:[#allocation2 + $0x8a0] sm:$0xff] %v638
      %671 = vst [vmem:[#allocation2 + $0x8e8] sm:$0xff] %v639
      %v672 = vld [vmem:[%s607 + $0x1] sm:$0xff]
      %v673 = vld [vmem:[%s607 + $0x9] sm:$0xff]
      %v674 = vld [vmem:[%s607 + $0x19] sm:$0xff]
      %v675 = vld [vmem:[%s607 + $0x21] sm:$0xff]
      %v676 = vld [vmem:[%s607 + $0x31] sm:$0xff]
      %v677 = vld [vmem:[%s607 + $0x39] sm:$0xff]
      %v678 = vld [vmem:[%s607 + $0x49] sm:$0xff]
      %v679 = vld [vmem:[%s607 + $0x51] sm:$0xff]
      %v680 = vld [vmem:[%s607 + $0x61] sm:$0xff]
      %v681 = vld [vmem:[%s607 + $0x69] sm:$0xff]
      %v682 = vld [vmem:[%s607 + $0x79] sm:$0xff]
      %v683 = vld [vmem:[%s607 + $0x81] sm:$0xff]
      %v684 = vld [vmem:[%s607 + $0x91] sm:$0xff]
      %v685 = vld [vmem:[%s607 + $0x99] sm:$0xff]
      %v686 = vld [vmem:[%s607 + $0xa9] sm:$0xff]
      %v687 = vld [vmem:[%s607 + $0xb1] sm:$0xff]
      %v688 = vld [vmem:[%s607 + $0xc1] sm:$0xff]
      %v689 = vld [vmem:[%s607 + $0xc9] sm:$0xff]
      %v690 = vld [vmem:[%s607 + $0xd9] sm:$0xff]
      %v691 = vld [vmem:[%s607 + $0xe1] sm:$0xff]
      %v692 = vld [vmem:[%s607 + $0xf1] sm:$0xff]
      %v693 = vld [vmem:[%s607 + $0xf9] sm:$0xff]
      %v694 = vld [vmem:[%s607 + $0x109] sm:$0xff]
      %v695 = vld [vmem:[%s607 + $0x111] sm:$0xff]
      %v696 = vld [vmem:[%s607 + $0x121] sm:$0xff]
      %v697 = vld [vmem:[%s607 + $0x129] sm:$0xff]
      %v698 = vld [vmem:[%s607 + $0x139] sm:$0xff]
      %v699 = vld [vmem:[%s607 + $0x141] sm:$0xff]
      %v700 = vld [vmem:[%s607 + $0x151] sm:$0xff]
      %v701 = vld [vmem:[%s607 + $0x159] sm:$0xff]
      %v702 = vld [vmem:[%s607 + $0x169] sm:$0xff]
      %v703 = vld [vmem:[%s607 + $0x171] sm:$0xff]
      %704 = vst [vmem:[#allocation2 + $0x38] sm:$0xff] %v672
      %705 = vst [vmem:[#allocation2 + $0x80] sm:$0xff] %v673
      %706 = vst [vmem:[#allocation2 + $0xc8] sm:$0xff] %v674
      %707 = vst [vmem:[#allocation2 + $0x110] sm:$0xff] %v675
      %708 = vst [vmem:[#allocation2 + $0x158] sm:$0xff] %v676
      %709 = vst [vmem:[#allocation2 + $0x1a0] sm:$0xff] %v677
      %710 = vst [vmem:[#allocation2 + $0x1e8] sm:$0xff] %v678
      %711 = vst [vmem:[#allocation2 + $0x230] sm:$0xff] %v679
      %712 = vst [vmem:[#allocation2 + $0x278] sm:$0xff] %v680
      %713 = vst [vmem:[#allocation2 + $0x2c0] sm:$0xff] %v681
      %714 = vst [vmem:[#allocation2 + $0x308] sm:$0xff] %v682
      %715 = vst [vmem:[#allocation2 + $0x350] sm:$0xff] %v683
      %716 = vst [vmem:[#allocation2 + $0x398] sm:$0xff] %v684
      %717 = vst [vmem:[#allocation2 + $0x3e0] sm:$0xff] %v685
      %718 = vst [vmem:[#allocation2 + $0x428] sm:$0xff] %v686
      %719 = vst [vmem:[#allocation2 + $0x470] sm:$0xff] %v687
      %720 = vst [vmem:[#allocation2 + $0x4b8] sm:$0xff] %v688
      %721 = vst [vmem:[#allocation2 + $0x500] sm:$0xff] %v689
      %722 = vst [vmem:[#allocation2 + $0x548] sm:$0xff] %v690
      %723 = vst [vmem:[#allocation2 + $0x590] sm:$0xff] %v691
      %724 = vst [vmem:[#allocation2 + $0x5d8] sm:$0xff] %v692
      %725 = vst [vmem:[#allocation2 + $0x620] sm:$0xff] %v693
      %726 = vst [vmem:[#allocation2 + $0x668] sm:$0xff] %v694
      %727 = vst [vmem:[#allocation2 + $0x6b0] sm:$0xff] %v695
      %728 = vst [vmem:[#allocation2 + $0x6f8] sm:$0xff] %v696
      %729 = vst [vmem:[#allocation2 + $0x740] sm:$0xff] %v697
      %730 = vst [vmem:[#allocation2 + $0x788] sm:$0xff] %v698
      %731 = vst [vmem:[#allocation2 + $0x7d0] sm:$0xff] %v699
      %732 = vst [vmem:[#allocation2 + $0x818] sm:$0xff] %v700
      %733 = vst [vmem:[#allocation2 + $0x860] sm:$0xff] %v701
      %734 = vst [vmem:[#allocation2 + $0x8a8] sm:$0xff] %v702
      %735 = vst [vmem:[#allocation2 + $0x8f0] sm:$0xff] %v703
      %v736 = vld [vmem:[%s607 + $0x2] sm:$0xff]
      %v737 = vld [vmem:[%s607 + $0xa] sm:$0xff]
      %v738 = vld [vmem:[%s607 + $0x1a] sm:$0xff]
      %v739 = vld [vmem:[%s607 + $0x22] sm:$0xff]
      %v740 = vld [vmem:[%s607 + $0x32] sm:$0xff]
      %v741 = vld [vmem:[%s607 + $0x3a] sm:$0xff]
      %v742 = vld [vmem:[%s607 + $0x4a] sm:$0xff]
      %v743 = vld [vmem:[%s607 + $0x52] sm:$0xff]
      %v744 = vld [vmem:[%s607 + $0x62] sm:$0xff]
      %v745 = vld [vmem:[%s607 + $0x6a] sm:$0xff]
      %v746 = vld [vmem:[%s607 + $0x7a] sm:$0xff]
      %v747 = vld [vmem:[%s607 + $0x82] sm:$0xff]
      %v748 = vld [vmem:[%s607 + $0x92] sm:$0xff]
      %v749 = vld [vmem:[%s607 + $0x9a] sm:$0xff]
      %v750 = vld [vmem:[%s607 + $0xaa] sm:$0xff]
      %v751 = vld [vmem:[%s607 + $0xb2] sm:$0xff]
      %v752 = vld [vmem:[%s607 + $0xc2] sm:$0xff]
      %v753 = vld [vmem:[%s607 + $0xca] sm:$0xff]
      %v754 = vld [vmem:[%s607 + $0xda] sm:$0xff]
      %v755 = vld [vmem:[%s607 + $0xe2] sm:$0xff]
      %v756 = vld [vmem:[%s607 + $0xf2] sm:$0xff]
      %v757 = vld [vmem:[%s607 + $0xfa] sm:$0xff]
      %v758 = vld [vmem:[%s607 + $0x10a] sm:$0xff]
      %v759 = vld [vmem:[%s607 + $0x112] sm:$0xff]
      %v760 = vld [vmem:[%s607 + $0x122] sm:$0xff]
      %v761 = vld [vmem:[%s607 + $0x12a] sm:$0xff]
      %v762 = vld [vmem:[%s607 + $0x13a] sm:$0xff]
      %v763 = vld [vmem:[%s607 + $0x142] sm:$0xff]
      %v764 = vld [vmem:[%s607 + $0x152] sm:$0xff]
      %v765 = vld [vmem:[%s607 + $0x15a] sm:$0xff]
      %v766 = vld [vmem:[%s607 + $0x16a] sm:$0xff]
      %v767 = vld [vmem:[%s607 + $0x172] sm:$0xff]
      %768 = vst [vmem:[#allocation2 + $0x40] sm:$0xff] %v736
      %769 = vst [vmem:[#allocation2 + $0x88] sm:$0xff] %v737
      %770 = vst [vmem:[#allocation2 + $0xd0] sm:$0xff] %v738
      %771 = vst [vmem:[#allocation2 + $0x118] sm:$0xff] %v739
      %772 = vst [vmem:[#allocation2 + $0x160] sm:$0xff] %v740
      %773 = vst [vmem:[#allocation2 + $0x1a8] sm:$0xff] %v741
      %774 = vst [vmem:[#allocation2 + $0x1f0] sm:$0xff] %v742
      %775 = vst [vmem:[#allocation2 + $0x238] sm:$0xff] %v743
      %776 = vst [vmem:[#allocation2 + $0x280] sm:$0xff] %v744
      %777 = vst [vmem:[#allocation2 + $0x2c8] sm:$0xff] %v745
      %778 = vst [vmem:[#allocation2 + $0x310] sm:$0xff] %v746
      %779 = vst [vmem:[#allocation2 + $0x358] sm:$0xff] %v747
      %780 = vst [vmem:[#allocation2 + $0x3a0] sm:$0xff] %v748
      %781 = vst [vmem:[#allocation2 + $0x3e8] sm:$0xff] %v749
      %782 = vst [vmem:[#allocation2 + $0x430] sm:$0xff] %v750
      %783 = vst [vmem:[#allocation2 + $0x478] sm:$0xff] %v751
      %784 = vst [vmem:[#allocation2 + $0x4c0] sm:$0xff] %v752
      %785 = vst [vmem:[#allocation2 + $0x508] sm:$0xff] %v753
      %786 = vst [vmem:[#allocation2 + $0x550] sm:$0xff] %v754
      %787 = vst [vmem:[#allocation2 + $0x598] sm:$0xff] %v755
      %788 = vst [vmem:[#allocation2 + $0x5e0] sm:$0xff] %v756
      %789 = vst [vmem:[#allocation2 + $0x628] sm:$0xff] %v757
      %790 = vst [vmem:[#allocation2 + $0x670] sm:$0xff] %v758
      %791 = vst [vmem:[#allocation2 + $0x6b8] sm:$0xff] %v759
      %792 = vst [vmem:[#allocation2 + $0x700] sm:$0xff] %v760
      %793 = vst [vmem:[#allocation2 + $0x748] sm:$0xff] %v761
      %794 = vst [vmem:[#allocation2 + $0x790] sm:$0xff] %v762
      %795 = vst [vmem:[#allocation2 + $0x7d8] sm:$0xff] %v763
      %796 = vst [vmem:[#allocation2 + $0x820] sm:$0xff] %v764
      %797 = vst [vmem:[#allocation2 + $0x868] sm:$0xff] %v765
      %798 = vst [vmem:[#allocation2 + $0x8b0] sm:$0xff] %v766
      %799 = vst [vmem:[#allocation2 + $0x8f8] sm:$0xff] %v767
      %v800 = vld [vmem:[#allocation2] sm:$0xff]
      %v801 = vld [vmem:[#allocation2 + $0x8] sm:$0xff]
      %v802 = vld [vmem:[#allocation2 + $0x10] sm:$0xff]
      %v803 = vld [vmem:[#allocation2 + $0x18] sm:$0xff]
      %v804 = vld [vmem:[#allocation2 + $0x20] sm:$0xff]
      %v805 = vld [vmem:[#allocation2 + $0x28] sm:$0xff]
      %v806 = vld [vmem:[#allocation2 + $0x30] sm:$0xff]
      %v807 = vld [vmem:[#allocation2 + $0x38] sm:$0xff]
      %v808 = vld [vmem:[#allocation2 + $0x40] sm:$0xff]
      %v809 = vld [vmem:[#allocation2 + $0x48] sm:$0xff]
      %v810 = vld [vmem:[#allocation2 + $0x50] sm:$0xff]
      %v811 = vld [vmem:[#allocation2 + $0x58] sm:$0xff]
      %v812 = vld [vmem:[#allocation2 + $0x60] sm:$0xff]
      %v813 = vld [vmem:[#allocation2 + $0x68] sm:$0xff]
      %v814 = vld [vmem:[#allocation2 + $0x70] sm:$0xff]
      %v815 = vld [vmem:[#allocation2 + $0x78] sm:$0xff]
      %v816 = vld [vmem:[#allocation2 + $0x80] sm:$0xff]
      %v817 = vld [vmem:[#allocation2 + $0x88] sm:$0xff]
      %v818 = vld [vmem:[#allocation2 + $0x90] sm:$0xff]
      %v819 = vld [vmem:[#allocation2 + $0x98] sm:$0xff]
      %v820 = vld [vmem:[#allocation2 + $0xa0] sm:$0xff]
      %v821 = vld [vmem:[#allocation2 + $0xa8] sm:$0xff]
      %v822 = vld [vmem:[#allocation2 + $0xb0] sm:$0xff]
      %v823 = vld [vmem:[#allocation2 + $0xb8] sm:$0xff]
      %v824 = vld [vmem:[#allocation2 + $0xc0] sm:$0xff]
      %v825 = vld [vmem:[#allocation2 + $0xc8] sm:$0xff]
      %v826 = vld [vmem:[#allocation2 + $0xd0] sm:$0xff]
      %v827 = vld [vmem:[#allocation2 + $0xd8] sm:$0xff]
      %v828 = vld [vmem:[#allocation2 + $0xe0] sm:$0xff]
      %v829 = vld [vmem:[#allocation2 + $0xe8] sm:$0xff]
      %v830 = vld [vmem:[#allocation2 + $0xf0] sm:$0xff]
      %v831 = vld [vmem:[#allocation2 + $0xf8] sm:$0xff]
      %v832 = vld [vmem:[#allocation2 + $0x100] sm:$0xff]
      %v833 = vld [vmem:[#allocation2 + $0x108] sm:$0xff]
      %v834 = vld [vmem:[#allocation2 + $0x110] sm:$0xff]
      %v835 = vld [vmem:[#allocation2 + $0x118] sm:$0xff]
      %v836 = vld [vmem:[#allocation2 + $0x120] sm:$0xff]
      %v837 = vld [vmem:[#allocation2 + $0x128] sm:$0xff]
      %v838 = vld [vmem:[#allocation2 + $0x130] sm:$0xff]
      %v839 = vld [vmem:[#allocation2 + $0x138] sm:$0xff]
      %v840 = vld [vmem:[#allocation2 + $0x140] sm:$0xff]
      %v841 = vld [vmem:[#allocation2 + $0x148] sm:$0xff]
      %v842 = vld [vmem:[#allocation2 + $0x150] sm:$0xff]
      %v843 = vld [vmem:[#allocation2 + $0x158] sm:$0xff]
      %v844 = vld [vmem:[#allocation2 + $0x160] sm:$0xff]
      %v845 = vld [vmem:[#allocation2 + $0x168] sm:$0xff]
      %v846 = vld [vmem:[#allocation2 + $0x170] sm:$0xff]
      %v847 = vld [vmem:[#allocation2 + $0x178] sm:$0xff]
      %v848 = vld [vmem:[#allocation2 + $0x180] sm:$0xff]
      %v849 = vld [vmem:[#allocation2 + $0x188] sm:$0xff]
      %v850 = vld [vmem:[#allocation2 + $0x190] sm:$0xff]
      %v851 = vld [vmem:[#allocation2 + $0x198] sm:$0xff]
      %v852 = vld [vmem:[#allocation2 + $0x1a0] sm:$0xff]
      %v853 = vld [vmem:[#allocation2 + $0x1a8] sm:$0xff]
      %v854 = vld [vmem:[#allocation2 + $0x1b0] sm:$0xff]
      %v855 = vld [vmem:[#allocation2 + $0x1b8] sm:$0xff]
      %v856 = vld [vmem:[#allocation2 + $0x1c0] sm:$0xff]
      %v857 = vld [vmem:[#allocation2 + $0x1c8] sm:$0xff]
      %v858 = vld [vmem:[#allocation2 + $0x1d0] sm:$0xff]
      %v859 = vld [vmem:[#allocation2 + $0x1d8] sm:$0xff]
      %v860 = vld [vmem:[#allocation2 + $0x1e0] sm:$0xff]
      %v861 = vld [vmem:[#allocation2 + $0x1e8] sm:$0xff]
      %v862 = vld [vmem:[#allocation2 + $0x1f0] sm:$0xff]
      %v863 = vld [vmem:[#allocation2 + $0x1f8] sm:$0xff]
      %v864 = vld [vmem:[#allocation2 + $0x200] sm:$0xff]
      %v865 = vld [vmem:[#allocation2 + $0x208] sm:$0xff]
      %v866 = vld [vmem:[#allocation2 + $0x210] sm:$0xff]
      %v867 = vld [vmem:[#allocation2 + $0x218] sm:$0xff]
      %v868 = vld [vmem:[#allocation2 + $0x220] sm:$0xff]
      %v869 = vld [vmem:[#allocation2 + $0x228] sm:$0xff]
      %v870 = vld [vmem:[#allocation2 + $0x230] sm:$0xff]
      %v871 = vld [vmem:[#allocation2 + $0x238] sm:$0xff]
      %v872 = vld [vmem:[#allocation2 + $0x240] sm:$0xff]
      %v873 = vld [vmem:[#allocation2 + $0x248] sm:$0xff]
      %v874 = vld [vmem:[#allocation2 + $0x250] sm:$0xff]
      %v875 = vld [vmem:[#allocation2 + $0x258] sm:$0xff]
      %v876 = vld [vmem:[#allocation2 + $0x260] sm:$0xff]
      %v877 = vld [vmem:[#allocation2 + $0x268] sm:$0xff]
      %v878 = vld [vmem:[#allocation2 + $0x270] sm:$0xff]
      %v879 = vld [vmem:[#allocation2 + $0x278] sm:$0xff]
      %v880 = vld [vmem:[#allocation2 + $0x280] sm:$0xff]
      %v881 = vld [vmem:[#allocation2 + $0x288] sm:$0xff]
      %v882 = vld [vmem:[#allocation2 + $0x290] sm:$0xff]
      %v883 = vld [vmem:[#allocation2 + $0x298] sm:$0xff]
      %v884 = vld [vmem:[#allocation2 + $0x2a0] sm:$0xff]
      %v885 = vld [vmem:[#allocation2 + $0x2a8] sm:$0xff]
      %v886 = vld [vmem:[#allocation2 + $0x2b0] sm:$0xff]
      %v887 = vld [vmem:[#allocation2 + $0x2b8] sm:$0xff]
      %v888 = vld [vmem:[#allocation2 + $0x2c0] sm:$0xff]
      %v889 = vld [vmem:[#allocation2 + $0x2c8] sm:$0xff]
      %v890 = vld [vmem:[#allocation2 + $0x2d0] sm:$0xff]
      %v891 = vld [vmem:[#allocation2 + $0x2d8] sm:$0xff]
      %v892 = vld [vmem:[#allocation2 + $0x2e0] sm:$0xff]
      %v893 = vld [vmem:[#allocation2 + $0x2e8] sm:$0xff]
      %v894 = vld [vmem:[#allocation2 + $0x2f0] sm:$0xff]
      %v895 = vld [vmem:[#allocation2 + $0x2f8] sm:$0xff]
      %v896 = vld [vmem:[#allocation2 + $0x300] sm:$0xff]
      %v897 = vld [vmem:[#allocation2 + $0x308] sm:$0xff]
      %v898 = vld [vmem:[#allocation2 + $0x310] sm:$0xff]
      %v899 = vld [vmem:[#allocation2 + $0x318] sm:$0xff]
      %v900 = vld [vmem:[#allocation2 + $0x320] sm:$0xff]
      %v901 = vld [vmem:[#allocation2 + $0x328] sm:$0xff]
      %v902 = vld [vmem:[#allocation2 + $0x330] sm:$0xff]
      %v903 = vld [vmem:[#allocation2 + $0x338] sm:$0xff]
      %v904 = vld [vmem:[#allocation2 + $0x340] sm:$0xff]
      %v905 = vld [vmem:[#allocation2 + $0x348] sm:$0xff]
      %v906 = vld [vmem:[#allocation2 + $0x350] sm:$0xff]
      %v907 = vld [vmem:[#allocation2 + $0x358] sm:$0xff]
      %v908 = vld [vmem:[#allocation2 + $0x360] sm:$0xff]
      %v909 = vld [vmem:[#allocation2 + $0x368] sm:$0xff]
      %v910 = vld [vmem:[#allocation2 + $0x370] sm:$0xff]
      %v911 = vld [vmem:[#allocation2 + $0x378] sm:$0xff]
      %v912 = vld [vmem:[#allocation2 + $0x380] sm:$0xff]
      %v913 = vld [vmem:[#allocation2 + $0x388] sm:$0xff]
      %v914 = vld [vmem:[#allocation2 + $0x390] sm:$0xff]
      %v915 = vld [vmem:[#allocation2 + $0x398] sm:$0xff]
      %v916 = vld [vmem:[#allocation2 + $0x3a0] sm:$0xff]
      %v917 = vld [vmem:[#allocation2 + $0x3a8] sm:$0xff]
      %v918 = vld [vmem:[#allocation2 + $0x3b0] sm:$0xff]
      %v919 = vld [vmem:[#allocation2 + $0x3b8] sm:$0xff]
      %v920 = vld [vmem:[#allocation2 + $0x3c0] sm:$0xff]
      %v921 = vld [vmem:[#allocation2 + $0x3c8] sm:$0xff]
      %v922 = vld [vmem:[#allocation2 + $0x3d0] sm:$0xff]
      %v923 = vld [vmem:[#allocation2 + $0x3d8] sm:$0xff]
      %v924 = vld [vmem:[#allocation2 + $0x3e0] sm:$0xff]
      %v925 = vld [vmem:[#allocation2 + $0x3e8] sm:$0xff]
      %v926 = vld [vmem:[#allocation2 + $0x3f0] sm:$0xff]
      %v927 = vld [vmem:[#allocation2 + $0x3f8] sm:$0xff]
      %v928 = vld [vmem:[#allocation2 + $0x400] sm:$0xff]
      %v929 = vld [vmem:[#allocation2 + $0x408] sm:$0xff]
      %v930 = vld [vmem:[#allocation2 + $0x410] sm:$0xff]
      %v931 = vld [vmem:[#allocation2 + $0x418] sm:$0xff]
      %v932 = vld [vmem:[#allocation2 + $0x420] sm:$0xff]
      %v933 = vld [vmem:[#allocation2 + $0x428] sm:$0xff]
      %v934 = vld [vmem:[#allocation2 + $0x430] sm:$0xff]
      %v935 = vld [vmem:[#allocation2 + $0x438] sm:$0xff]
      %v936 = vld [vmem:[#allocation2 + $0x440] sm:$0xff]
      %v937 = vld [vmem:[#allocation2 + $0x448] sm:$0xff]
      %v938 = vld [vmem:[#allocation2 + $0x450] sm:$0xff]
      %v939 = vld [vmem:[#allocation2 + $0x458] sm:$0xff]
      %v940 = vld [vmem:[#allocation2 + $0x460] sm:$0xff]
      %v941 = vld [vmem:[#allocation2 + $0x468] sm:$0xff]
      %v942 = vld [vmem:[#allocation2 + $0x470] sm:$0xff]
      %v943 = vld [vmem:[#allocation2 + $0x478] sm:$0xff]
      %v944 = vld [vmem:[#allocation2 + $0x480] sm:$0xff]
      %v945 = vld [vmem:[#allocation2 + $0x488] sm:$0xff]
      %v946 = vld [vmem:[#allocation2 + $0x490] sm:$0xff]
      %v947 = vld [vmem:[#allocation2 + $0x498] sm:$0xff]
      %v948 = vld [vmem:[#allocation2 + $0x4a0] sm:$0xff]
      %v949 = vld [vmem:[#allocation2 + $0x4a8] sm:$0xff]
      %v950 = vld [vmem:[#allocation2 + $0x4b0] sm:$0xff]
      %v951 = vld [vmem:[#allocation2 + $0x4b8] sm:$0xff]
      %v952 = vld [vmem:[#allocation2 + $0x4c0] sm:$0xff]
      %v953 = vld [vmem:[#allocation2 + $0x4c8] sm:$0xff]
      %v954 = vld [vmem:[#allocation2 + $0x4d0] sm:$0xff]
      %v955 = vld [vmem:[#allocation2 + $0x4d8] sm:$0xff]
      %v956 = vld [vmem:[#allocation2 + $0x4e0] sm:$0xff]
      %v957 = vld [vmem:[#allocation2 + $0x4e8] sm:$0xff]
      %v958 = vld [vmem:[#allocation2 + $0x4f0] sm:$0xff]
      %v959 = vld [vmem:[#allocation2 + $0x4f8] sm:$0xff]
      %v960 = vld [vmem:[#allocation2 + $0x500] sm:$0xff]
      %v961 = vld [vmem:[#allocation2 + $0x508] sm:$0xff]
      %v962 = vld [vmem:[#allocation2 + $0x510] sm:$0xff]
      %v963 = vld [vmem:[#allocation2 + $0x518] sm:$0xff]
      %v964 = vld [vmem:[#allocation2 + $0x520] sm:$0xff]
      %v965 = vld [vmem:[#allocation2 + $0x528] sm:$0xff]
      %v966 = vld [vmem:[#allocation2 + $0x530] sm:$0xff]
      %v967 = vld [vmem:[#allocation2 + $0x538] sm:$0xff]
      %v968 = vld [vmem:[#allocation2 + $0x540] sm:$0xff]
      %v969 = vld [vmem:[#allocation2 + $0x548] sm:$0xff]
      %v970 = vld [vmem:[#allocation2 + $0x550] sm:$0xff]
      %v971 = vld [vmem:[#allocation2 + $0x558] sm:$0xff]
      %v972 = vld [vmem:[#allocation2 + $0x560] sm:$0xff]
      %v973 = vld [vmem:[#allocation2 + $0x568] sm:$0xff]
      %v974 = vld [vmem:[#allocation2 + $0x570] sm:$0xff]
      %v975 = vld [vmem:[#allocation2 + $0x578] sm:$0xff]
      %v976 = vld [vmem:[#allocation2 + $0x580] sm:$0xff]
      %v977 = vld [vmem:[#allocation2 + $0x588] sm:$0xff]
      %v978 = vld [vmem:[#allocation2 + $0x590] sm:$0xff]
      %v979 = vld [vmem:[#allocation2 + $0x598] sm:$0xff]
      %v980 = vld [vmem:[#allocation2 + $0x5a0] sm:$0xff]
      %v981 = vld [vmem:[#allocation2 + $0x5a8] sm:$0xff]
      %v982 = vld [vmem:[#allocation2 + $0x5b0] sm:$0xff]
      %v983 = vld [vmem:[#allocation2 + $0x5b8] sm:$0xff]
      %v984 = vld [vmem:[#allocation2 + $0x5c0] sm:$0xff]
      %v985 = vld [vmem:[#allocation2 + $0x5c8] sm:$0xff]
      %v986 = vld [vmem:[#allocation2 + $0x5d0] sm:$0xff]
      %v987 = vld [vmem:[#allocation2 + $0x5d8] sm:$0xff]
      %v988 = vld [vmem:[#allocation2 + $0x5e0] sm:$0xff]
      %v989 = vld [vmem:[#allocation2 + $0x5e8] sm:$0xff]
      %v990 = vld [vmem:[#allocation2 + $0x5f0] sm:$0xff]
      %v991 = vld [vmem:[#allocation2 + $0x5f8] sm:$0xff]
      %v992 = vld [vmem:[#allocation2 + $0x600] sm:$0xff]
      %v993 = vld [vmem:[#allocation2 + $0x608] sm:$0xff]
      %v994 = vld [vmem:[#allocation2 + $0x610] sm:$0xff]
      %v995 = vld [vmem:[#allocation2 + $0x618] sm:$0xff]
      %v996 = vld [vmem:[#allocation2 + $0x620] sm:$0xff]
      %v997 = vld [vmem:[#allocation2 + $0x628] sm:$0xff]
      %v998 = vld [vmem:[#allocation2 + $0x630] sm:$0xff]
      %v999 = vld [vmem:[#allocation2 + $0x638] sm:$0xff]
      %v1000 = vld [vmem:[#allocation2 + $0x640] sm:$0xff]
      %v1001 = vld [vmem:[#allocation2 + $0x648] sm:$0xff]
      %v1002 = vld [vmem:[#allocation2 + $0x650] sm:$0xff]
      %v1003 = vld [vmem:[#allocation2 + $0x658] sm:$0xff]
      %v1004 = vld [vmem:[#allocation2 + $0x660] sm:$0xff]
      %v1005 = vld [vmem:[#allocation2 + $0x668] sm:$0xff]
      %v1006 = vld [vmem:[#allocation2 + $0x670] sm:$0xff]
      %v1007 = vld [vmem:[#allocation2 + $0x678] sm:$0xff]
      %v1008 = vld [vmem:[#allocation2 + $0x680] sm:$0xff]
      %v1009 = vld [vmem:[#allocation2 + $0x688] sm:$0xff]
      %v1010 = vld [vmem:[#allocation2 + $0x690] sm:$0xff]
      %v1011 = vld [vmem:[#allocation2 + $0x698] sm:$0xff]
      %v1012 = vld [vmem:[#allocation2 + $0x6a0] sm:$0xff]
      %v1013 = vld [vmem:[#allocation2 + $0x6a8] sm:$0xff]
      %v1014 = vld [vmem:[#allocation2 + $0x6b0] sm:$0xff]
      %v1015 = vld [vmem:[#allocation2 + $0x6b8] sm:$0xff]
      %v1016 = vld [vmem:[#allocation2 + $0x6c0] sm:$0xff]
      %v1017 = vld [vmem:[#allocation2 + $0x6c8] sm:$0xff]
      %v1018 = vld [vmem:[#allocation2 + $0x6d0] sm:$0xff]
      %v1019 = vld [vmem:[#allocation2 + $0x6d8] sm:$0xff]
      %v1020 = vld [vmem:[#allocation2 + $0x6e0] sm:$0xff]
      %v1021 = vld [vmem:[#allocation2 + $0x6e8] sm:$0xff]
      %v1022 = vld [vmem:[#allocation2 + $0x6f0] sm:$0xff]
      %v1023 = vld [vmem:[#allocation2 + $0x6f8] sm:$0xff]
      %v1024 = vld [vmem:[#allocation2 + $0x700] sm:$0xff]
      %v1025 = vld [vmem:[#allocation2 + $0x708] sm:$0xff]
      %v1026 = vld [vmem:[#allocation2 + $0x710] sm:$0xff]
      %v1027 = vld [vmem:[#allocation2 + $0x718] sm:$0xff]
      %v1028 = vld [vmem:[#allocation2 + $0x720] sm:$0xff]
      %v1029 = vld [vmem:[#allocation2 + $0x728] sm:$0xff]
      %v1030 = vld [vmem:[#allocation2 + $0x730] sm:$0xff]
      %v1031 = vld [vmem:[#allocation2 + $0x738] sm:$0xff]
      %v1032 = vld [vmem:[#allocation2 + $0x740] sm:$0xff]
      %v1033 = vld [vmem:[#allocation2 + $0x748] sm:$0xff]
      %v1034 = vld [vmem:[#allocation2 + $0x750] sm:$0xff]
      %v1035 = vld [vmem:[#allocation2 + $0x758] sm:$0xff]
      %v1036 = vld [vmem:[#allocation2 + $0x760] sm:$0xff]
      %v1037 = vld [vmem:[#allocation2 + $0x768] sm:$0xff]
      %v1038 = vld [vmem:[#allocation2 + $0x770] sm:$0xff]
      %v1039 = vld [vmem:[#allocation2 + $0x778] sm:$0xff]
      %v1040 = vld [vmem:[#allocation2 + $0x780] sm:$0xff]
      %v1041 = vld [vmem:[#allocation2 + $0x788] sm:$0xff]
      %v1042 = vld [vmem:[#allocation2 + $0x790] sm:$0xff]
      %v1043 = vld [vmem:[#allocation2 + $0x798] sm:$0xff]
      %v1044 = vld [vmem:[#allocation2 + $0x7a0] sm:$0xff]
      %v1045 = vld [vmem:[#allocation2 + $0x7a8] sm:$0xff]
      %v1046 = vld [vmem:[#allocation2 + $0x7b0] sm:$0xff]
      %v1047 = vld [vmem:[#allocation2 + $0x7b8] sm:$0xff]
      %v1048 = vld [vmem:[#allocation2 + $0x7c0] sm:$0xff]
      %v1049 = vld [vmem:[#allocation2 + $0x7c8] sm:$0xff]
      %v1050 = vld [vmem:[#allocation2 + $0x7d0] sm:$0xff]
      %v1051 = vld [vmem:[#allocation2 + $0x7d8] sm:$0xff]
      %v1052 = vld [vmem:[#allocation2 + $0x7e0] sm:$0xff]
      %v1053 = vld [vmem:[#allocation2 + $0x7e8] sm:$0xff]
      %v1054 = vld [vmem:[#allocation2 + $0x7f0] sm:$0xff]
      %v1055 = vld [vmem:[#allocation2 + $0x7f8] sm:$0xff]
      %v1056 = vld [vmem:[#allocation2 + $0x800] sm:$0xff]
      %v1057 = vld [vmem:[#allocation2 + $0x808] sm:$0xff]
      %v1058 = vld [vmem:[#allocation2 + $0x810] sm:$0xff]
      %v1059 = vld [vmem:[#allocation2 + $0x818] sm:$0xff]
      %v1060 = vld [vmem:[#allocation2 + $0x820] sm:$0xff]
      %v1061 = vld [vmem:[#allocation2 + $0x828] sm:$0xff]
      %v1062 = vld [vmem:[#allocation2 + $0x830] sm:$0xff]
      %v1063 = vld [vmem:[#allocation2 + $0x838] sm:$0xff]
      %v1064 = vld [vmem:[#allocation2 + $0x840] sm:$0xff]
      %v1065 = vld [vmem:[#allocation2 + $0x848] sm:$0xff]
      %v1066 = vld [vmem:[#allocation2 + $0x850] sm:$0xff]
      %v1067 = vld [vmem:[#allocation2 + $0x858] sm:$0xff]
      %v1068 = vld [vmem:[#allocation2 + $0x860] sm:$0xff]
      %v1069 = vld [vmem:[#allocation2 + $0x868] sm:$0xff]
      %v1070 = vld [vmem:[#allocation2 + $0x870] sm:$0xff]
      %v1071 = vld [vmem:[#allocation2 + $0x878] sm:$0xff]
      %v1072 = vld [vmem:[#allocation2 + $0x880] sm:$0xff]
      %v1073 = vld [vmem:[#allocation2 + $0x888] sm:$0xff]
      %v1074 = vld [vmem:[#allocation2 + $0x890] sm:$0xff]
      %v1075 = vld [vmem:[#allocation2 + $0x898] sm:$0xff]
      %v1076 = vld [vmem:[#allocation2 + $0x8a0] sm:$0xff]
      %v1077 = vld [vmem:[#allocation2 + $0x8a8] sm:$0xff]
      %v1078 = vld [vmem:[#allocation2 + $0x8b0] sm:$0xff]
      %v1079 = vld [vmem:[#allocation2 + $0x8b8] sm:$0xff]
      %v1080 = vld [vmem:[#allocation2 + $0x8c0] sm:$0xff]
      %v1081 = vld [vmem:[#allocation2 + $0x8c8] sm:$0xff]
      %v1082 = vld [vmem:[#allocation2 + $0x8d0] sm:$0xff]
      %v1083 = vld [vmem:[#allocation2 + $0x8d8] sm:$0xff]
      %v1084 = vld [vmem:[#allocation2 + $0x8e0] sm:$0xff]
      %v1085 = vld [vmem:[#allocation2 + $0x8e8] sm:$0xff]
      %v1086 = vld [vmem:[#allocation2 + $0x8f0] sm:$0xff]
      %v1087 = vld [vmem:[#allocation2 + $0x8f8] sm:$0xff]
      %v1088 = vld [vmem:[%s210] sm:$0xff]
      %v1089 = vld [vmem:[%s210 + $0x8] sm:$0xff]
      %v1090 = vld [vmem:[%s210 + $0x10] sm:$0xff]
      %v1091 = vld [vmem:[%s210 + $0x18] sm:$0xff]
      %v1092 = vld [vmem:[%s210 + $0x20] sm:$0xff]
      %v1093 = vld [vmem:[%s210 + $0x28] sm:$0xff]
      %v1094 = vld [vmem:[%s210 + $0x30] sm:$0xff]
      %v1095 = vld [vmem:[%s210 + $0x38] sm:$0xff]
      %v1096 = vld [vmem:[%s210 + $0x40] sm:$0xff]
      %v1097 = vld [vmem:[%s210 + $0x48] sm:$0xff]
      %v1098 = vld [vmem:[%s210 + $0x50] sm:$0xff]
      %v1099 = vld [vmem:[%s210 + $0x58] sm:$0xff]
      %v1100 = vld [vmem:[%s210 + $0x60] sm:$0xff]
      %v1101 = vld [vmem:[%s210 + $0x68] sm:$0xff]
      %v1102 = vld [vmem:[%s210 + $0x70] sm:$0xff]
      %v1103 = vld [vmem:[%s210 + $0x78] sm:$0xff]
      %v1104 = vld [vmem:[%s210 + $0x80] sm:$0xff]
      %v1105 = vld [vmem:[%s210 + $0x88] sm:$0xff]
      %v1106 = vld [vmem:[%s210 + $0x90] sm:$0xff]
      %v1107 = vld [vmem:[%s210 + $0x98] sm:$0xff]
      %v1108 = vld [vmem:[%s210 + $0xa0] sm:$0xff]
      %v1109 = vld [vmem:[%s210 + $0xa8] sm:$0xff]
      %v1110 = vld [vmem:[%s210 + $0xb0] sm:$0xff]
      %v1111 = vld [vmem:[%s210 + $0xb8] sm:$0xff]
      %v1112 = vld [vmem:[%s210 + $0xc0] sm:$0xff]
      %v1113 = vld [vmem:[%s210 + $0xc8] sm:$0xff]
      %v1114 = vld [vmem:[%s210 + $0xd0] sm:$0xff]
      %v1115 = vld [vmem:[%s210 + $0xd8] sm:$0xff]
      %v1116 = vld [vmem:[%s210 + $0xe0] sm:$0xff]
      %v1117 = vld [vmem:[%s210 + $0xe8] sm:$0xff]
      %v1118 = vld [vmem:[%s210 + $0xf0] sm:$0xff]
      %v1119 = vld [vmem:[%s210 + $0xf8] sm:$0xff]
      %v1120 = vld [vmem:[%s210 + $0x100] sm:$0xff]
      %v1121 = vld [vmem:[%s210 + $0x108] sm:$0xff]
      %v1122 = vld [vmem:[%s210 + $0x110] sm:$0xff]
      %v1123 = vld [vmem:[%s210 + $0x118] sm:$0xff]
      %v1124 = vld [vmem:[%s210 + $0x120] sm:$0xff]
      %v1125 = vld [vmem:[%s210 + $0x128] sm:$0xff]
      %v1126 = vld [vmem:[%s210 + $0x130] sm:$0xff]
      %v1127 = vld [vmem:[%s210 + $0x138] sm:$0xff]
      %v1128 = vld [vmem:[%s210 + $0x140] sm:$0xff]
      %v1129 = vld [vmem:[%s210 + $0x148] sm:$0xff]
      %v1130 = vld [vmem:[%s210 + $0x150] sm:$0xff]
      %v1131 = vld [vmem:[%s210 + $0x158] sm:$0xff]
      %v1132 = vld [vmem:[%s210 + $0x160] sm:$0xff]
      %v1133 = vld [vmem:[%s210 + $0x168] sm:$0xff]
      %v1134 = vld [vmem:[%s210 + $0x170] sm:$0xff]
      %v1135 = vld [vmem:[%s210 + $0x178] sm:$0xff]
      %v1136 = vld [vmem:[%s210 + $0x180] sm:$0xff]
      %v1137 = vld [vmem:[%s210 + $0x188] sm:$0xff]
      %v1138 = vld [vmem:[%s210 + $0x190] sm:$0xff]
      %v1139 = vld [vmem:[%s210 + $0x198] sm:$0xff]
      %v1140 = vld [vmem:[%s210 + $0x1a0] sm:$0xff]
      %v1141 = vld [vmem:[%s210 + $0x1a8] sm:$0xff]
      %v1142 = vld [vmem:[%s210 + $0x1b0] sm:$0xff]
      %v1143 = vld [vmem:[%s210 + $0x1b8] sm:$0xff]
      %v1144 = vld [vmem:[%s210 + $0x1c0] sm:$0xff]
      %v1145 = vld [vmem:[%s210 + $0x1c8] sm:$0xff]
      %v1146 = vld [vmem:[%s210 + $0x1d0] sm:$0xff]
      %v1147 = vld [vmem:[%s210 + $0x1d8] sm:$0xff]
      %v1148 = vld [vmem:[%s210 + $0x1e0] sm:$0xff]
      %v1149 = vld [vmem:[%s210 + $0x1e8] sm:$0xff]
      %v1150 = vld [vmem:[%s210 + $0x1f0] sm:$0xff]
      %v1151 = vld [vmem:[%s210 + $0x1f8] sm:$0xff]
      %v1152 = vld [vmem:[%s210 + $0x200] sm:$0xff]
      %v1153 = vld [vmem:[%s210 + $0x208] sm:$0xff]
      %v1154 = vld [vmem:[%s210 + $0x210] sm:$0xff]
      %v1155 = vld [vmem:[%s210 + $0x218] sm:$0xff]
      %v1156 = vld [vmem:[%s210 + $0x220] sm:$0xff]
      %v1157 = vld [vmem:[%s210 + $0x228] sm:$0xff]
      %v1158 = vld [vmem:[%s210 + $0x230] sm:$0xff]
      %v1159 = vld [vmem:[%s210 + $0x238] sm:$0xff]
      %v1160 = vld [vmem:[%s210 + $0x240] sm:$0xff]
      %v1161 = vld [vmem:[%s210 + $0x248] sm:$0xff]
      %v1162 = vld [vmem:[%s210 + $0x250] sm:$0xff]
      %v1163 = vld [vmem:[%s210 + $0x258] sm:$0xff]
      %v1164 = vld [vmem:[%s210 + $0x260] sm:$0xff]
      %v1165 = vld [vmem:[%s210 + $0x268] sm:$0xff]
      %v1166 = vld [vmem:[%s210 + $0x270] sm:$0xff]
      %v1167 = vld [vmem:[%s210 + $0x278] sm:$0xff]
      %v1168 = vld [vmem:[%s210 + $0x280] sm:$0xff]
      %v1169 = vld [vmem:[%s210 + $0x288] sm:$0xff]
      %v1170 = vld [vmem:[%s210 + $0x290] sm:$0xff]
      %v1171 = vld [vmem:[%s210 + $0x298] sm:$0xff]
      %v1172 = vld [vmem:[%s210 + $0x2a0] sm:$0xff]
      %v1173 = vld [vmem:[%s210 + $0x2a8] sm:$0xff]
      %v1174 = vld [vmem:[%s210 + $0x2b0] sm:$0xff]
      %v1175 = vld [vmem:[%s210 + $0x2b8] sm:$0xff]
      %v1176 = vld [vmem:[%s210 + $0x2c0] sm:$0xff]
      %v1177 = vld [vmem:[%s210 + $0x2c8] sm:$0xff]
      %v1178 = vld [vmem:[%s210 + $0x2d0] sm:$0xff]
      %v1179 = vld [vmem:[%s210 + $0x2d8] sm:$0xff]
      %v1180 = vld [vmem:[%s210 + $0x2e0] sm:$0xff]
      %v1181 = vld [vmem:[%s210 + $0x2e8] sm:$0xff]
      %v1182 = vld [vmem:[%s210 + $0x2f0] sm:$0xff]
      %v1183 = vld [vmem:[%s210 + $0x2f8] sm:$0xff]
      %v1184 = vld [vmem:[%s210 + $0x300] sm:$0xff]
      %v1185 = vld [vmem:[%s210 + $0x308] sm:$0xff]
      %v1186 = vld [vmem:[%s210 + $0x310] sm:$0xff]
      %v1187 = vld [vmem:[%s210 + $0x318] sm:$0xff]
      %v1188 = vld [vmem:[%s210 + $0x320] sm:$0xff]
      %v1189 = vld [vmem:[%s210 + $0x328] sm:$0xff]
      %v1190 = vld [vmem:[%s210 + $0x330] sm:$0xff]
      %v1191 = vld [vmem:[%s210 + $0x338] sm:$0xff]
      %v1192 = vld [vmem:[%s210 + $0x340] sm:$0xff]
      %v1193 = vld [vmem:[%s210 + $0x348] sm:$0xff]
      %v1194 = vld [vmem:[%s210 + $0x350] sm:$0xff]
      %v1195 = vld [vmem:[%s210 + $0x358] sm:$0xff]
      %v1196 = vld [vmem:[%s210 + $0x360] sm:$0xff]
      %v1197 = vld [vmem:[%s210 + $0x368] sm:$0xff]
      %v1198 = vld [vmem:[%s210 + $0x370] sm:$0xff]
      %v1199 = vld [vmem:[%s210 + $0x378] sm:$0xff]
      %v1200 = vld [vmem:[%s210 + $0x380] sm:$0xff]
      %v1201 = vld [vmem:[%s210 + $0x388] sm:$0xff]
      %v1202 = vld [vmem:[%s210 + $0x390] sm:$0xff]
      %v1203 = vld [vmem:[%s210 + $0x398] sm:$0xff]
      %v1204 = vld [vmem:[%s210 + $0x3a0] sm:$0xff]
      %v1205 = vld [vmem:[%s210 + $0x3a8] sm:$0xff]
      %v1206 = vld [vmem:[%s210 + $0x3b0] sm:$0xff]
      %v1207 = vld [vmem:[%s210 + $0x3b8] sm:$0xff]
      %v1208 = vld [vmem:[%s210 + $0x3c0] sm:$0xff]
      %v1209 = vld [vmem:[%s210 + $0x3c8] sm:$0xff]
      %v1210 = vld [vmem:[%s210 + $0x3d0] sm:$0xff]
      %v1211 = vld [vmem:[%s210 + $0x3d8] sm:$0xff]
      %v1212 = vld [vmem:[%s210 + $0x3e0] sm:$0xff]
      %v1213 = vld [vmem:[%s210 + $0x3e8] sm:$0xff]
      %v1214 = vld [vmem:[%s210 + $0x3f0] sm:$0xff]
      %v1215 = vld [vmem:[%s210 + $0x3f8] sm:$0xff]
      %v1216 = vld [vmem:[%s210 + $0x400] sm:$0xff]
      %v1217 = vld [vmem:[%s210 + $0x408] sm:$0xff]
      %v1218 = vld [vmem:[%s210 + $0x410] sm:$0xff]
      %v1219 = vld [vmem:[%s210 + $0x418] sm:$0xff]
      %v1220 = vld [vmem:[%s210 + $0x420] sm:$0xff]
      %v1221 = vld [vmem:[%s210 + $0x428] sm:$0xff]
      %v1222 = vld [vmem:[%s210 + $0x430] sm:$0xff]
      %v1223 = vld [vmem:[%s210 + $0x438] sm:$0xff]
      %v1224 = vld [vmem:[%s210 + $0x440] sm:$0xff]
      %v1225 = vld [vmem:[%s210 + $0x448] sm:$0xff]
      %v1226 = vld [vmem:[%s210 + $0x450] sm:$0xff]
      %v1227 = vld [vmem:[%s210 + $0x458] sm:$0xff]
      %v1228 = vld [vmem:[%s210 + $0x460] sm:$0xff]
      %v1229 = vld [vmem:[%s210 + $0x468] sm:$0xff]
      %v1230 = vld [vmem:[%s210 + $0x470] sm:$0xff]
      %v1231 = vld [vmem:[%s210 + $0x478] sm:$0xff]
      %v1232 = vld [vmem:[%s213] sm:$0x1]
      %v1234 = vperm.slane %v1232, 0
      %1236 = vmatpush.msra.mxu0 %v1103
      %1237 = vmatpush.msra.mxu0 %v1102
      %1238 = vmatpush.msra.mxu0 %v1101
      %1239 = vmatpush.msra.mxu0 %v1100
      %1240 = vmatpush.msra.mxu0 %v1099
      %1241 = vmatpush.msra.mxu0 %v1098
      %1242 = vmatpush.msra.mxu0 %v1097
      %1243 = vmatpush.msra.mxu0 %v1096
      %1244 = vmatpush.msra.mxu0 %v1095
      %1245 = vmatpush.msra.mxu0 %v1094
      %1246 = vmatpush.msra.mxu0 %v1093
      %1247 = vmatpush.msra.mxu0 %v1092
      %1248 = vmatpush.msra.mxu0 %v1091
      %1249 = vmatpush.msra.mxu0 %v1090
      %1250 = vmatpush.msra.mxu0 %v1089
      %1251 = vmatpush.msra.mxu0 %v1088
      %1252 = vmatmul.f32.gmra.mxu0 %v800
      %v1253 = vpop.f32.mrf.mxu0
      %v1254 = vadd.f32 %v1234, %v1253
      %1255 = vmatmul.f32.gmra.mxu0 %v809
      %v1256 = vpop.f32.mrf.mxu0
      %v1257 = vadd.f32 %v1234, %v1256
      %1258 = vmatmul.f32.gmra.mxu0 %v818
      %v1259 = vpop.f32.mrf.mxu0
      %v1260 = vadd.f32 %v1234, %v1259
      %1261 = vmatmul.f32.gmra.mxu0 %v827
      %v1262 = vpop.f32.mrf.mxu0
      %v1263 = vadd.f32 %v1234, %v1262
      %1264 = vmatmul.f32.gmra.mxu0 %v836
      %v1265 = vpop.f32.mrf.mxu0
      %v1266 = vadd.f32 %v1234, %v1265
      %1267 = vmatmul.f32.gmra.mxu0 %v845
      %v1268 = vpop.f32.mrf.mxu0
      %v1269 = vadd.f32 %v1234, %v1268
      %1270 = vmatmul.f32.gmra.mxu0 %v854
      %v1271 = vpop.f32.mrf.mxu0
      %v1272 = vadd.f32 %v1234, %v1271
      %1273 = vmatmul.f32.gmra.mxu0 %v863
      %v1274 = vpop.f32.mrf.mxu0
      %v1275 = vadd.f32 %v1234, %v1274
      %1276 = vmatmul.f32.gmra.mxu0 %v872
      %v1277 = vpop.f32.mrf.mxu0
      %v1278 = vadd.f32 %v1234, %v1277
      %1279 = vmatmul.f32.gmra.mxu0 %v881
      %v1280 = vpop.f32.mrf.mxu0
      %v1281 = vadd.f32 %v1234, %v1280
      %1282 = vmatmul.f32.gmra.mxu0 %v890
      %v1283 = vpop.f32.mrf.mxu0
      %v1284 = vadd.f32 %v1234, %v1283
      %1285 = vmatmul.f32.gmra.mxu0 %v899
      %v1286 = vpop.f32.mrf.mxu0
      %v1287 = vadd.f32 %v1234, %v1286
      %1288 = vmatmul.f32.gmra.mxu0 %v908
      %v1289 = vpop.f32.mrf.mxu0
      %v1290 = vadd.f32 %v1234, %v1289
      %1291 = vmatmul.f32.gmra.mxu0 %v917
      %v1292 = vpop.f32.mrf.mxu0
      %v1293 = vadd.f32 %v1234, %v1292
      %1294 = vmatmul.f32.gmra.mxu0 %v926
      %v1295 = vpop.f32.mrf.mxu0
      %v1296 = vadd.f32 %v1234, %v1295
      %1297 = vmatmul.f32.gmra.mxu0 %v935
      %v1298 = vpop.f32.mrf.mxu0
      %v1299 = vadd.f32 %v1234, %v1298
      %1300 = vmatmul.f32.gmra.mxu0 %v944
      %v1301 = vpop.f32.mrf.mxu0
      %v1302 = vadd.f32 %v1234, %v1301
      %1303 = vmatmul.f32.gmra.mxu0 %v953
      %v1304 = vpop.f32.mrf.mxu0
      %v1305 = vadd.f32 %v1234, %v1304
      %1306 = vmatmul.f32.gmra.mxu0 %v962
      %v1307 = vpop.f32.mrf.mxu0
      %v1308 = vadd.f32 %v1234, %v1307
      %1309 = vmatmul.f32.gmra.mxu0 %v971
      %v1310 = vpop.f32.mrf.mxu0
      %v1311 = vadd.f32 %v1234, %v1310
      %1312 = vmatmul.f32.gmra.mxu0 %v980
      %v1313 = vpop.f32.mrf.mxu0
      %v1314 = vadd.f32 %v1234, %v1313
      %1315 = vmatmul.f32.gmra.mxu0 %v989
      %v1316 = vpop.f32.mrf.mxu0
      %v1317 = vadd.f32 %v1234, %v1316
      %1318 = vmatmul.f32.gmra.mxu0 %v998
      %v1319 = vpop.f32.mrf.mxu0
      %v1320 = vadd.f32 %v1234, %v1319
      %1321 = vmatmul.f32.gmra.mxu0 %v1007
      %v1322 = vpop.f32.mrf.mxu0
      %v1323 = vadd.f32 %v1234, %v1322
      %1324 = vmatmul.f32.gmra.mxu0 %v1016
      %v1325 = vpop.f32.mrf.mxu0
      %v1326 = vadd.f32 %v1234, %v1325
      %1327 = vmatmul.f32.gmra.mxu0 %v1025
      %v1328 = vpop.f32.mrf.mxu0
      %v1329 = vadd.f32 %v1234, %v1328
      %1330 = vmatmul.f32.gmra.mxu0 %v1034
      %v1331 = vpop.f32.mrf.mxu0
      %v1332 = vadd.f32 %v1234, %v1331
      %1333 = vmatmul.f32.gmra.mxu0 %v1043
      %v1334 = vpop.f32.mrf.mxu0
      %v1335 = vadd.f32 %v1234, %v1334
      %1336 = vmatmul.f32.gmra.mxu0 %v1052
      %v1337 = vpop.f32.mrf.mxu0
      %v1338 = vadd.f32 %v1234, %v1337
      %1339 = vmatmul.f32.gmra.mxu0 %v1061
      %v1340 = vpop.f32.mrf.mxu0
      %v1341 = vadd.f32 %v1234, %v1340
      %1342 = vmatmul.f32.gmra.mxu0 %v1070
      %v1343 = vpop.f32.mrf.mxu0
      %v1344 = vadd.f32 %v1234, %v1343
      %1345 = vmatmul.f32.gmra.mxu0 %v1079
      %v1346 = vpop.f32.mrf.mxu0
      %v1347 = vadd.f32 %v1234, %v1346
      %1348 = vdwg.mxu0
      %1349 = vmatpush.msra.mxu0 %v1119
      %1350 = vmatpush.msra.mxu0 %v1118
      %1351 = vmatpush.msra.mxu0 %v1117
      %1352 = vmatpush.msra.mxu0 %v1116
      %1353 = vmatpush.msra.mxu0 %v1115
      %1354 = vmatpush.msra.mxu0 %v1114
      %1355 = vmatpush.msra.mxu0 %v1113
      %1356 = vmatpush.msra.mxu0 %v1112
      %1357 = vmatpush.msra.mxu0 %v1111
      %1358 = vmatpush.msra.mxu0 %v1110
      %1359 = vmatpush.msra.mxu0 %v1109
      %1360 = vmatpush.msra.mxu0 %v1108
      %1361 = vmatpush.msra.mxu0 %v1107
      %1362 = vmatpush.msra.mxu0 %v1106
      %1363 = vmatpush.msra.mxu0 %v1105
      %1364 = vmatpush.msra.mxu0 %v1104
      %1365 = vmatmul.f32.gmra.mxu0 %v801
      %v1366 = vpop.f32.mrf.mxu0
      %v1367 = vadd.f32 %v1254, %v1366
      %1368 = vmatmul.f32.gmra.mxu0 %v810
      %v1369 = vpop.f32.mrf.mxu0
      %v1370 = vadd.f32 %v1257, %v1369
      %1371 = vmatmul.f32.gmra.mxu0 %v819
      %v1372 = vpop.f32.mrf.mxu0
      %v1373 = vadd.f32 %v1260, %v1372
      %1374 = vmatmul.f32.gmra.mxu0 %v828
      %v1375 = vpop.f32.mrf.mxu0
      %v1376 = vadd.f32 %v1263, %v1375
      %1377 = vmatmul.f32.gmra.mxu0 %v837
      %v1378 = vpop.f32.mrf.mxu0
      %v1379 = vadd.f32 %v1266, %v1378
      %1380 = vmatmul.f32.gmra.mxu0 %v846
      %v1381 = vpop.f32.mrf.mxu0
      %v1382 = vadd.f32 %v1269, %v1381
      %1383 = vmatmul.f32.gmra.mxu0 %v855
      %v1384 = vpop.f32.mrf.mxu0
      %v1385 = vadd.f32 %v1272, %v1384
      %1386 = vmatmul.f32.gmra.mxu0 %v864
      %v1387 = vpop.f32.mrf.mxu0
      %v1388 = vadd.f32 %v1275, %v1387
      %1389 = vmatmul.f32.gmra.mxu0 %v873
      %v1390 = vpop.f32.mrf.mxu0
      %v1391 = vadd.f32 %v1278, %v1390
      %1392 = vmatmul.f32.gmra.mxu0 %v882
      %v1393 = vpop.f32.mrf.mxu0
      %v1394 = vadd.f32 %v1281, %v1393
      %1395 = vmatmul.f32.gmra.mxu0 %v891
      %v1396 = vpop.f32.mrf.mxu0
      %v1397 = vadd.f32 %v1284, %v1396
      %1398 = vmatmul.f32.gmra.mxu0 %v900
      %v1399 = vpop.f32.mrf.mxu0
      %v1400 = vadd.f32 %v1287, %v1399
      %1401 = vmatmul.f32.gmra.mxu0 %v909
      %v1402 = vpop.f32.mrf.mxu0
      %v1403 = vadd.f32 %v1290, %v1402
      %1404 = vmatmul.f32.gmra.mxu0 %v918
      %v1405 = vpop.f32.mrf.mxu0
      %v1406 = vadd.f32 %v1293, %v1405
      %1407 = vmatmul.f32.gmra.mxu0 %v927
      %v1408 = vpop.f32.mrf.mxu0
      %v1409 = vadd.f32 %v1296, %v1408
      %1410 = vmatmul.f32.gmra.mxu0 %v936
      %v1411 = vpop.f32.mrf.mxu0
      %v1412 = vadd.f32 %v1299, %v1411
      %1413 = vmatmul.f32.gmra.mxu0 %v945
      %v1414 = vpop.f32.mrf.mxu0
      %v1415 = vadd.f32 %v1302, %v1414
      %1416 = vmatmul.f32.gmra.mxu0 %v954
      %v1417 = vpop.f32.mrf.mxu0
      %v1418 = vadd.f32 %v1305, %v1417
      %1419 = vmatmul.f32.gmra.mxu0 %v963
      %v1420 = vpop.f32.mrf.mxu0
      %v1421 = vadd.f32 %v1308, %v1420
      %1422 = vmatmul.f32.gmra.mxu0 %v972
      %v1423 = vpop.f32.mrf.mxu0
      %v1424 = vadd.f32 %v1311, %v1423
      %1425 = vmatmul.f32.gmra.mxu0 %v981
      %v1426 = vpop.f32.mrf.mxu0
      %v1427 = vadd.f32 %v1314, %v1426
      %1428 = vmatmul.f32.gmra.mxu0 %v990
      %v1429 = vpop.f32.mrf.mxu0
      %v1430 = vadd.f32 %v1317, %v1429
      %1431 = vmatmul.f32.gmra.mxu0 %v999
      %v1432 = vpop.f32.mrf.mxu0
      %v1433 = vadd.f32 %v1320, %v1432
      %1434 = vmatmul.f32.gmra.mxu0 %v1008
      %v1435 = vpop.f32.mrf.mxu0
      %v1436 = vadd.f32 %v1323, %v1435
      %1437 = vmatmul.f32.gmra.mxu0 %v1017
      %v1438 = vpop.f32.mrf.mxu0
      %v1439 = vadd.f32 %v1326, %v1438
      %1440 = vmatmul.f32.gmra.mxu0 %v1026
      %v1441 = vpop.f32.mrf.mxu0
      %v1442 = vadd.f32 %v1329, %v1441
      %1443 = vmatmul.f32.gmra.mxu0 %v1035
      %v1444 = vpop.f32.mrf.mxu0
      %v1445 = vadd.f32 %v1332, %v1444
      %1446 = vmatmul.f32.gmra.mxu0 %v1044
      %v1447 = vpop.f32.mrf.mxu0
      %v1448 = vadd.f32 %v1335, %v1447
      %1449 = vmatmul.f32.gmra.mxu0 %v1053
      %v1450 = vpop.f32.mrf.mxu0
      %v1451 = vadd.f32 %v1338, %v1450
      %1452 = vmatmul.f32.gmra.mxu0 %v1062
      %v1453 = vpop.f32.mrf.mxu0
      %v1454 = vadd.f32 %v1341, %v1453
      %1455 = vmatmul.f32.gmra.mxu0 %v1071
      %v1456 = vpop.f32.mrf.mxu0
      %v1457 = vadd.f32 %v1344, %v1456
      %1458 = vmatmul.f32.gmra.mxu0 %v1080
      %v1459 = vpop.f32.mrf.mxu0
      %v1460 = vadd.f32 %v1347, %v1459
      %1461 = vdwg.mxu0
      %1462 = vmatpush.msra.mxu0 %v1135
      %1463 = vmatpush.msra.mxu0 %v1134
      %1464 = vmatpush.msra.mxu0 %v1133
      %1465 = vmatpush.msra.mxu0 %v1132
      %1466 = vmatpush.msra.mxu0 %v1131
      %1467 = vmatpush.msra.mxu0 %v1130
      %1468 = vmatpush.msra.mxu0 %v1129
      %1469 = vmatpush.msra.mxu0 %v1128
      %1470 = vmatpush.msra.mxu0 %v1127
      %1471 = vmatpush.msra.mxu0 %v1126
      %1472 = vmatpush.msra.mxu0 %v1125
      %1473 = vmatpush.msra.mxu0 %v1124
      %1474 = vmatpush.msra.mxu0 %v1123
      %1475 = vmatpush.msra.mxu0 %v1122
      %1476 = vmatpush.msra.mxu0 %v1121
      %1477 = vmatpush.msra.mxu0 %v1120
      %1478 = vmatmul.f32.gmra.mxu0 %v802
      %v1479 = vpop.f32.mrf.mxu0
      %v1480 = vadd.f32 %v1367, %v1479
      %1481 = vmatmul.f32.gmra.mxu0 %v811
      %v1482 = vpop.f32.mrf.mxu0
      %v1483 = vadd.f32 %v1370, %v1482
      %1484 = vmatmul.f32.gmra.mxu0 %v820
      %v1485 = vpop.f32.mrf.mxu0
      %v1486 = vadd.f32 %v1373, %v1485
      %1487 = vmatmul.f32.gmra.mxu0 %v829
      %v1488 = vpop.f32.mrf.mxu0
      %v1489 = vadd.f32 %v1376, %v1488
      %1490 = vmatmul.f32.gmra.mxu0 %v838
      %v1491 = vpop.f32.mrf.mxu0
      %v1492 = vadd.f32 %v1379, %v1491
      %1493 = vmatmul.f32.gmra.mxu0 %v847
      %v1494 = vpop.f32.mrf.mxu0
      %v1495 = vadd.f32 %v1382, %v1494
      %1496 = vmatmul.f32.gmra.mxu0 %v856
      %v1497 = vpop.f32.mrf.mxu0
      %v1498 = vadd.f32 %v1385, %v1497
      %1499 = vmatmul.f32.gmra.mxu0 %v865
      %v1500 = vpop.f32.mrf.mxu0
      %v1501 = vadd.f32 %v1388, %v1500
      %1502 = vmatmul.f32.gmra.mxu0 %v874
      %v1503 = vpop.f32.mrf.mxu0
      %v1504 = vadd.f32 %v1391, %v1503
      %1505 = vmatmul.f32.gmra.mxu0 %v883
      %v1506 = vpop.f32.mrf.mxu0
      %v1507 = vadd.f32 %v1394, %v1506
      %1508 = vmatmul.f32.gmra.mxu0 %v892
      %v1509 = vpop.f32.mrf.mxu0
      %v1510 = vadd.f32 %v1397, %v1509
      %1511 = vmatmul.f32.gmra.mxu0 %v901
      %v1512 = vpop.f32.mrf.mxu0
      %v1513 = vadd.f32 %v1400, %v1512
      %1514 = vmatmul.f32.gmra.mxu0 %v910
      %v1515 = vpop.f32.mrf.mxu0
      %v1516 = vadd.f32 %v1403, %v1515
      %1517 = vmatmul.f32.gmra.mxu0 %v919
      %v1518 = vpop.f32.mrf.mxu0
      %v1519 = vadd.f32 %v1406, %v1518
      %1520 = vmatmul.f32.gmra.mxu0 %v928
      %v1521 = vpop.f32.mrf.mxu0
      %v1522 = vadd.f32 %v1409, %v1521
      %1523 = vmatmul.f32.gmra.mxu0 %v937
      %v1524 = vpop.f32.mrf.mxu0
      %v1525 = vadd.f32 %v1412, %v1524
      %1526 = vmatmul.f32.gmra.mxu0 %v946
      %v1527 = vpop.f32.mrf.mxu0
      %v1528 = vadd.f32 %v1415, %v1527
      %1529 = vmatmul.f32.gmra.mxu0 %v955
      %v1530 = vpop.f32.mrf.mxu0
      %v1531 = vadd.f32 %v1418, %v1530
      %1532 = vmatmul.f32.gmra.mxu0 %v964
      %v1533 = vpop.f32.mrf.mxu0
      %v1534 = vadd.f32 %v1421, %v1533
      %1535 = vmatmul.f32.gmra.mxu0 %v973
      %v1536 = vpop.f32.mrf.mxu0
      %v1537 = vadd.f32 %v1424, %v1536
      %1538 = vmatmul.f32.gmra.mxu0 %v982
      %v1539 = vpop.f32.mrf.mxu0
      %v1540 = vadd.f32 %v1427, %v1539
      %1541 = vmatmul.f32.gmra.mxu0 %v991
      %v1542 = vpop.f32.mrf.mxu0
      %v1543 = vadd.f32 %v1430, %v1542
      %1544 = vmatmul.f32.gmra.mxu0 %v1000
      %v1545 = vpop.f32.mrf.mxu0
      %v1546 = vadd.f32 %v1433, %v1545
      %1547 = vmatmul.f32.gmra.mxu0 %v1009
      %v1548 = vpop.f32.mrf.mxu0
      %v1549 = vadd.f32 %v1436, %v1548
      %1550 = vmatmul.f32.gmra.mxu0 %v1018
      %v1551 = vpop.f32.mrf.mxu0
      %v1552 = vadd.f32 %v1439, %v1551
      %1553 = vmatmul.f32.gmra.mxu0 %v1027
      %v1554 = vpop.f32.mrf.mxu0
      %v1555 = vadd.f32 %v1442, %v1554
      %1556 = vmatmul.f32.gmra.mxu0 %v1036
      %v1557 = vpop.f32.mrf.mxu0
      %v1558 = vadd.f32 %v1445, %v1557
      %1559 = vmatmul.f32.gmra.mxu0 %v1045
      %v1560 = vpop.f32.mrf.mxu0
      %v1561 = vadd.f32 %v1448, %v1560
      %1562 = vmatmul.f32.gmra.mxu0 %v1054
      %v1563 = vpop.f32.mrf.mxu0
      %v1564 = vadd.f32 %v1451, %v1563
      %1565 = vmatmul.f32.gmra.mxu0 %v1063
      %v1566 = vpop.f32.mrf.mxu0
      %v1567 = vadd.f32 %v1454, %v1566
      %1568 = vmatmul.f32.gmra.mxu0 %v1072
      %v1569 = vpop.f32.mrf.mxu0
      %v1570 = vadd.f32 %v1457, %v1569
      %1571 = vmatmul.f32.gmra.mxu0 %v1081
      %v1572 = vpop.f32.mrf.mxu0
      %v1573 = vadd.f32 %v1460, %v1572
      %1574 = vdwg.mxu0
      %1575 = vmatpush.msra.mxu0 %v1151
      %1576 = vmatpush.msra.mxu0 %v1150
      %1577 = vmatpush.msra.mxu0 %v1149
      %1578 = vmatpush.msra.mxu0 %v1148
      %1579 = vmatpush.msra.mxu0 %v1147
      %1580 = vmatpush.msra.mxu0 %v1146
      %1581 = vmatpush.msra.mxu0 %v1145
      %1582 = vmatpush.msra.mxu0 %v1144
      %1583 = vmatpush.msra.mxu0 %v1143
      %1584 = vmatpush.msra.mxu0 %v1142
      %1585 = vmatpush.msra.mxu0 %v1141
      %1586 = vmatpush.msra.mxu0 %v1140
      %1587 = vmatpush.msra.mxu0 %v1139
      %1588 = vmatpush.msra.mxu0 %v1138
      %1589 = vmatpush.msra.mxu0 %v1137
      %1590 = vmatpush.msra.mxu0 %v1136
      %1591 = vmatmul.f32.gmra.mxu0 %v803
      %v1592 = vpop.f32.mrf.mxu0
      %v1593 = vadd.f32 %v1480, %v1592
      %1594 = vmatmul.f32.gmra.mxu0 %v812
      %v1595 = vpop.f32.mrf.mxu0
      %v1596 = vadd.f32 %v1483, %v1595
      %1597 = vmatmul.f32.gmra.mxu0 %v821
      %v1598 = vpop.f32.mrf.mxu0
      %v1599 = vadd.f32 %v1486, %v1598
      %1600 = vmatmul.f32.gmra.mxu0 %v830
      %v1601 = vpop.f32.mrf.mxu0
      %v1602 = vadd.f32 %v1489, %v1601
      %1603 = vmatmul.f32.gmra.mxu0 %v839
      %v1604 = vpop.f32.mrf.mxu0
      %v1605 = vadd.f32 %v1492, %v1604
      %1606 = vmatmul.f32.gmra.mxu0 %v848
      %v1607 = vpop.f32.mrf.mxu0
      %v1608 = vadd.f32 %v1495, %v1607
      %1609 = vmatmul.f32.gmra.mxu0 %v857
      %v1610 = vpop.f32.mrf.mxu0
      %v1611 = vadd.f32 %v1498, %v1610
      %1612 = vmatmul.f32.gmra.mxu0 %v866
      %v1613 = vpop.f32.mrf.mxu0
      %v1614 = vadd.f32 %v1501, %v1613
      %1615 = vmatmul.f32.gmra.mxu0 %v875
      %v1616 = vpop.f32.mrf.mxu0
      %v1617 = vadd.f32 %v1504, %v1616
      %1618 = vmatmul.f32.gmra.mxu0 %v884
      %v1619 = vpop.f32.mrf.mxu0
      %v1620 = vadd.f32 %v1507, %v1619
      %1621 = vmatmul.f32.gmra.mxu0 %v893
      %v1622 = vpop.f32.mrf.mxu0
      %v1623 = vadd.f32 %v1510, %v1622
      %1624 = vmatmul.f32.gmra.mxu0 %v902
      %v1625 = vpop.f32.mrf.mxu0
      %v1626 = vadd.f32 %v1513, %v1625
      %1627 = vmatmul.f32.gmra.mxu0 %v911
      %v1628 = vpop.f32.mrf.mxu0
      %v1629 = vadd.f32 %v1516, %v1628
      %1630 = vmatmul.f32.gmra.mxu0 %v920
      %v1631 = vpop.f32.mrf.mxu0
      %v1632 = vadd.f32 %v1519, %v1631
      %1633 = vmatmul.f32.gmra.mxu0 %v929
      %v1634 = vpop.f32.mrf.mxu0
      %v1635 = vadd.f32 %v1522, %v1634
      %1636 = vmatmul.f32.gmra.mxu0 %v938
      %v1637 = vpop.f32.mrf.mxu0
      %v1638 = vadd.f32 %v1525, %v1637
      %1639 = vmatmul.f32.gmra.mxu0 %v947
      %v1640 = vpop.f32.mrf.mxu0
      %v1641 = vadd.f32 %v1528, %v1640
      %1642 = vmatmul.f32.gmra.mxu0 %v956
      %v1643 = vpop.f32.mrf.mxu0
      %v1644 = vadd.f32 %v1531, %v1643
      %1645 = vmatmul.f32.gmra.mxu0 %v965
      %v1646 = vpop.f32.mrf.mxu0
      %v1647 = vadd.f32 %v1534, %v1646
      %1648 = vmatmul.f32.gmra.mxu0 %v974
      %v1649 = vpop.f32.mrf.mxu0
      %v1650 = vadd.f32 %v1537, %v1649
      %1651 = vmatmul.f32.gmra.mxu0 %v983
      %v1652 = vpop.f32.mrf.mxu0
      %v1653 = vadd.f32 %v1540, %v1652
      %1654 = vmatmul.f32.gmra.mxu0 %v992
      %v1655 = vpop.f32.mrf.mxu0
      %v1656 = vadd.f32 %v1543, %v1655
      %1657 = vmatmul.f32.gmra.mxu0 %v1001
      %v1658 = vpop.f32.mrf.mxu0
      %v1659 = vadd.f32 %v1546, %v1658
      %1660 = vmatmul.f32.gmra.mxu0 %v1010
      %v1661 = vpop.f32.mrf.mxu0
      %v1662 = vadd.f32 %v1549, %v1661
      %1663 = vmatmul.f32.gmra.mxu0 %v1019
      %v1664 = vpop.f32.mrf.mxu0
      %v1665 = vadd.f32 %v1552, %v1664
      %1666 = vmatmul.f32.gmra.mxu0 %v1028
      %v1667 = vpop.f32.mrf.mxu0
      %v1668 = vadd.f32 %v1555, %v1667
      %1669 = vmatmul.f32.gmra.mxu0 %v1037
      %v1670 = vpop.f32.mrf.mxu0
      %v1671 = vadd.f32 %v1558, %v1670
      %1672 = vmatmul.f32.gmra.mxu0 %v1046
      %v1673 = vpop.f32.mrf.mxu0
      %v1674 = vadd.f32 %v1561, %v1673
      %1675 = vmatmul.f32.gmra.mxu0 %v1055
      %v1676 = vpop.f32.mrf.mxu0
      %v1677 = vadd.f32 %v1564, %v1676
      %1678 = vmatmul.f32.gmra.mxu0 %v1064
      %v1679 = vpop.f32.mrf.mxu0
      %v1680 = vadd.f32 %v1567, %v1679
      %1681 = vmatmul.f32.gmra.mxu0 %v1073
      %v1682 = vpop.f32.mrf.mxu0
      %v1683 = vadd.f32 %v1570, %v1682
      %1684 = vmatmul.f32.gmra.mxu0 %v1082
      %v1685 = vpop.f32.mrf.mxu0
      %v1686 = vadd.f32 %v1573, %v1685
      %1687 = vdwg.mxu0
      %1688 = vmatpush.msra.mxu0 %v1167
      %1689 = vmatpush.msra.mxu0 %v1166
      %1690 = vmatpush.msra.mxu0 %v1165
      %1691 = vmatpush.msra.mxu0 %v1164
      %1692 = vmatpush.msra.mxu0 %v1163
      %1693 = vmatpush.msra.mxu0 %v1162
      %1694 = vmatpush.msra.mxu0 %v1161
      %1695 = vmatpush.msra.mxu0 %v1160
      %1696 = vmatpush.msra.mxu0 %v1159
      %1697 = vmatpush.msra.mxu0 %v1158
      %1698 = vmatpush.msra.mxu0 %v1157
      %1699 = vmatpush.msra.mxu0 %v1156
      %1700 = vmatpush.msra.mxu0 %v1155
      %1701 = vmatpush.msra.mxu0 %v1154
      %1702 = vmatpush.msra.mxu0 %v1153
      %1703 = vmatpush.msra.mxu0 %v1152
      %1704 = vmatmul.f32.gmra.mxu0 %v804
      %v1705 = vpop.f32.mrf.mxu0
      %v1706 = vadd.f32 %v1593, %v1705
      %1707 = vmatmul.f32.gmra.mxu0 %v813
      %v1708 = vpop.f32.mrf.mxu0
      %v1709 = vadd.f32 %v1596, %v1708
      %1710 = vmatmul.f32.gmra.mxu0 %v822
      %v1711 = vpop.f32.mrf.mxu0
      %v1712 = vadd.f32 %v1599, %v1711
      %1713 = vmatmul.f32.gmra.mxu0 %v831
      %v1714 = vpop.f32.mrf.mxu0
      %v1715 = vadd.f32 %v1602, %v1714
      %1716 = vmatmul.f32.gmra.mxu0 %v840
      %v1717 = vpop.f32.mrf.mxu0
      %v1718 = vadd.f32 %v1605, %v1717
      %1719 = vmatmul.f32.gmra.mxu0 %v849
      %v1720 = vpop.f32.mrf.mxu0
      %v1721 = vadd.f32 %v1608, %v1720
      %1722 = vmatmul.f32.gmra.mxu0 %v858
      %v1723 = vpop.f32.mrf.mxu0
      %v1724 = vadd.f32 %v1611, %v1723
      %1725 = vmatmul.f32.gmra.mxu0 %v867
      %v1726 = vpop.f32.mrf.mxu0
      %v1727 = vadd.f32 %v1614, %v1726
      %1728 = vmatmul.f32.gmra.mxu0 %v876
      %v1729 = vpop.f32.mrf.mxu0
      %v1730 = vadd.f32 %v1617, %v1729
      %1731 = vmatmul.f32.gmra.mxu0 %v885
      %v1732 = vpop.f32.mrf.mxu0
      %v1733 = vadd.f32 %v1620, %v1732
      %1734 = vmatmul.f32.gmra.mxu0 %v894
      %v1735 = vpop.f32.mrf.mxu0
      %v1736 = vadd.f32 %v1623, %v1735
      %1737 = vmatmul.f32.gmra.mxu0 %v903
      %v1738 = vpop.f32.mrf.mxu0
      %v1739 = vadd.f32 %v1626, %v1738
      %1740 = vmatmul.f32.gmra.mxu0 %v912
      %v1741 = vpop.f32.mrf.mxu0
      %v1742 = vadd.f32 %v1629, %v1741
      %1743 = vmatmul.f32.gmra.mxu0 %v921
      %v1744 = vpop.f32.mrf.mxu0
      %v1745 = vadd.f32 %v1632, %v1744
      %1746 = vmatmul.f32.gmra.mxu0 %v930
      %v1747 = vpop.f32.mrf.mxu0
      %v1748 = vadd.f32 %v1635, %v1747
      %1749 = vmatmul.f32.gmra.mxu0 %v939
      %v1750 = vpop.f32.mrf.mxu0
      %v1751 = vadd.f32 %v1638, %v1750
      %1752 = vmatmul.f32.gmra.mxu0 %v948
      %v1753 = vpop.f32.mrf.mxu0
      %v1754 = vadd.f32 %v1641, %v1753
      %1755 = vmatmul.f32.gmra.mxu0 %v957
      %v1756 = vpop.f32.mrf.mxu0
      %v1757 = vadd.f32 %v1644, %v1756
      %1758 = vmatmul.f32.gmra.mxu0 %v966
      %v1759 = vpop.f32.mrf.mxu0
      %v1760 = vadd.f32 %v1647, %v1759
      %1761 = vmatmul.f32.gmra.mxu0 %v975
      %v1762 = vpop.f32.mrf.mxu0
      %v1763 = vadd.f32 %v1650, %v1762
      %1764 = vmatmul.f32.gmra.mxu0 %v984
      %v1765 = vpop.f32.mrf.mxu0
      %v1766 = vadd.f32 %v1653, %v1765
      %1767 = vmatmul.f32.gmra.mxu0 %v993
      %v1768 = vpop.f32.mrf.mxu0
      %v1769 = vadd.f32 %v1656, %v1768
      %1770 = vmatmul.f32.gmra.mxu0 %v1002
      %v1771 = vpop.f32.mrf.mxu0
      %v1772 = vadd.f32 %v1659, %v1771
      %1773 = vmatmul.f32.gmra.mxu0 %v1011
      %v1774 = vpop.f32.mrf.mxu0
      %v1775 = vadd.f32 %v1662, %v1774
      %1776 = vmatmul.f32.gmra.mxu0 %v1020
      %v1777 = vpop.f32.mrf.mxu0
      %v1778 = vadd.f32 %v1665, %v1777
      %1779 = vmatmul.f32.gmra.mxu0 %v1029
      %v1780 = vpop.f32.mrf.mxu0
      %v1781 = vadd.f32 %v1668, %v1780
      %1782 = vmatmul.f32.gmra.mxu0 %v1038
      %v1783 = vpop.f32.mrf.mxu0
      %v1784 = vadd.f32 %v1671, %v1783
      %1785 = vmatmul.f32.gmra.mxu0 %v1047
      %v1786 = vpop.f32.mrf.mxu0
      %v1787 = vadd.f32 %v1674, %v1786
      %1788 = vmatmul.f32.gmra.mxu0 %v1056
      %v1789 = vpop.f32.mrf.mxu0
      %v1790 = vadd.f32 %v1677, %v1789
      %1791 = vmatmul.f32.gmra.mxu0 %v1065
      %v1792 = vpop.f32.mrf.mxu0
      %v1793 = vadd.f32 %v1680, %v1792
      %1794 = vmatmul.f32.gmra.mxu0 %v1074
      %v1795 = vpop.f32.mrf.mxu0
      %v1796 = vadd.f32 %v1683, %v1795
      %1797 = vmatmul.f32.gmra.mxu0 %v1083
      %v1798 = vpop.f32.mrf.mxu0
      %v1799 = vadd.f32 %v1686, %v1798
      %1800 = vdwg.mxu0
      %1801 = vmatpush.msra.mxu0 %v1183
      %1802 = vmatpush.msra.mxu0 %v1182
      %1803 = vmatpush.msra.mxu0 %v1181
      %1804 = vmatpush.msra.mxu0 %v1180
      %1805 = vmatpush.msra.mxu0 %v1179
      %1806 = vmatpush.msra.mxu0 %v1178
      %1807 = vmatpush.msra.mxu0 %v1177
      %1808 = vmatpush.msra.mxu0 %v1176
      %1809 = vmatpush.msra.mxu0 %v1175
      %1810 = vmatpush.msra.mxu0 %v1174
      %1811 = vmatpush.msra.mxu0 %v1173
      %1812 = vmatpush.msra.mxu0 %v1172
      %1813 = vmatpush.msra.mxu0 %v1171
      %1814 = vmatpush.msra.mxu0 %v1170
      %1815 = vmatpush.msra.mxu0 %v1169
      %1816 = vmatpush.msra.mxu0 %v1168
      %1817 = vmatmul.f32.gmra.mxu0 %v805
      %v1818 = vpop.f32.mrf.mxu0
      %v1819 = vadd.f32 %v1706, %v1818
      %1820 = vmatmul.f32.gmra.mxu0 %v814
      %v1821 = vpop.f32.mrf.mxu0
      %v1822 = vadd.f32 %v1709, %v1821
      %1823 = vmatmul.f32.gmra.mxu0 %v823
      %v1824 = vpop.f32.mrf.mxu0
      %v1825 = vadd.f32 %v1712, %v1824
      %1826 = vmatmul.f32.gmra.mxu0 %v832
      %v1827 = vpop.f32.mrf.mxu0
      %v1828 = vadd.f32 %v1715, %v1827
      %1829 = vmatmul.f32.gmra.mxu0 %v841
      %v1830 = vpop.f32.mrf.mxu0
      %v1831 = vadd.f32 %v1718, %v1830
      %1832 = vmatmul.f32.gmra.mxu0 %v850
      %v1833 = vpop.f32.mrf.mxu0
      %v1834 = vadd.f32 %v1721, %v1833
      %1835 = vmatmul.f32.gmra.mxu0 %v859
      %v1836 = vpop.f32.mrf.mxu0
      %v1837 = vadd.f32 %v1724, %v1836
      %1838 = vmatmul.f32.gmra.mxu0 %v868
      %v1839 = vpop.f32.mrf.mxu0
      %v1840 = vadd.f32 %v1727, %v1839
      %1841 = vmatmul.f32.gmra.mxu0 %v877
      %v1842 = vpop.f32.mrf.mxu0
      %v1843 = vadd.f32 %v1730, %v1842
      %1844 = vmatmul.f32.gmra.mxu0 %v886
      %v1845 = vpop.f32.mrf.mxu0
      %v1846 = vadd.f32 %v1733, %v1845
      %1847 = vmatmul.f32.gmra.mxu0 %v895
      %v1848 = vpop.f32.mrf.mxu0
      %v1849 = vadd.f32 %v1736, %v1848
      %1850 = vmatmul.f32.gmra.mxu0 %v904
      %v1851 = vpop.f32.mrf.mxu0
      %v1852 = vadd.f32 %v1739, %v1851
      %1853 = vmatmul.f32.gmra.mxu0 %v913
      %v1854 = vpop.f32.mrf.mxu0
      %v1855 = vadd.f32 %v1742, %v1854
      %1856 = vmatmul.f32.gmra.mxu0 %v922
      %v1857 = vpop.f32.mrf.mxu0
      %v1858 = vadd.f32 %v1745, %v1857
      %1859 = vmatmul.f32.gmra.mxu0 %v931
      %v1860 = vpop.f32.mrf.mxu0
      %v1861 = vadd.f32 %v1748, %v1860
      %1862 = vmatmul.f32.gmra.mxu0 %v940
      %v1863 = vpop.f32.mrf.mxu0
      %v1864 = vadd.f32 %v1751, %v1863
      %1865 = vmatmul.f32.gmra.mxu0 %v949
      %v1866 = vpop.f32.mrf.mxu0
      %v1867 = vadd.f32 %v1754, %v1866
      %1868 = vmatmul.f32.gmra.mxu0 %v958
      %v1869 = vpop.f32.mrf.mxu0
      %v1870 = vadd.f32 %v1757, %v1869
      %1871 = vmatmul.f32.gmra.mxu0 %v967
      %v1872 = vpop.f32.mrf.mxu0
      %v1873 = vadd.f32 %v1760, %v1872
      %1874 = vmatmul.f32.gmra.mxu0 %v976
      %v1875 = vpop.f32.mrf.mxu0
      %v1876 = vadd.f32 %v1763, %v1875
      %1877 = vmatmul.f32.gmra.mxu0 %v985
      %v1878 = vpop.f32.mrf.mxu0
      %v1879 = vadd.f32 %v1766, %v1878
      %1880 = vmatmul.f32.gmra.mxu0 %v994
      %v1881 = vpop.f32.mrf.mxu0
      %v1882 = vadd.f32 %v1769, %v1881
      %1883 = vmatmul.f32.gmra.mxu0 %v1003
      %v1884 = vpop.f32.mrf.mxu0
      %v1885 = vadd.f32 %v1772, %v1884
      %1886 = vmatmul.f32.gmra.mxu0 %v1012
      %v1887 = vpop.f32.mrf.mxu0
      %v1888 = vadd.f32 %v1775, %v1887
      %1889 = vmatmul.f32.gmra.mxu0 %v1021
      %v1890 = vpop.f32.mrf.mxu0
      %v1891 = vadd.f32 %v1778, %v1890
      %1892 = vmatmul.f32.gmra.mxu0 %v1030
      %v1893 = vpop.f32.mrf.mxu0
      %v1894 = vadd.f32 %v1781, %v1893
      %1895 = vmatmul.f32.gmra.mxu0 %v1039
      %v1896 = vpop.f32.mrf.mxu0
      %v1897 = vadd.f32 %v1784, %v1896
      %1898 = vmatmul.f32.gmra.mxu0 %v1048
      %v1899 = vpop.f32.mrf.mxu0
      %v1900 = vadd.f32 %v1787, %v1899
      %1901 = vmatmul.f32.gmra.mxu0 %v1057
      %v1902 = vpop.f32.mrf.mxu0
      %v1903 = vadd.f32 %v1790, %v1902
      %1904 = vmatmul.f32.gmra.mxu0 %v1066
      %v1905 = vpop.f32.mrf.mxu0
      %v1906 = vadd.f32 %v1793, %v1905
      %1907 = vmatmul.f32.gmra.mxu0 %v1075
      %v1908 = vpop.f32.mrf.mxu0
      %v1909 = vadd.f32 %v1796, %v1908
      %1910 = vmatmul.f32.gmra.mxu0 %v1084
      %v1911 = vpop.f32.mrf.mxu0
      %v1912 = vadd.f32 %v1799, %v1911
      %1913 = vdwg.mxu0
      %1914 = vmatpush.msra.mxu0 %v1199
      %1915 = vmatpush.msra.mxu0 %v1198
      %1916 = vmatpush.msra.mxu0 %v1197
      %1917 = vmatpush.msra.mxu0 %v1196
      %1918 = vmatpush.msra.mxu0 %v1195
      %1919 = vmatpush.msra.mxu0 %v1194
      %1920 = vmatpush.msra.mxu0 %v1193
      %1921 = vmatpush.msra.mxu0 %v1192
      %1922 = vmatpush.msra.mxu0 %v1191
      %1923 = vmatpush.msra.mxu0 %v1190
      %1924 = vmatpush.msra.mxu0 %v1189
      %1925 = vmatpush.msra.mxu0 %v1188
      %1926 = vmatpush.msra.mxu0 %v1187
      %1927 = vmatpush.msra.mxu0 %v1186
      %1928 = vmatpush.msra.mxu0 %v1185
      %1929 = vmatpush.msra.mxu0 %v1184
      %1930 = vmatmul.f32.gmra.mxu0 %v806
      %v1931 = vpop.f32.mrf.mxu0
      %v1932 = vadd.f32 %v1819, %v1931
      %1933 = vmatmul.f32.gmra.mxu0 %v815
      %v1934 = vpop.f32.mrf.mxu0
      %v1935 = vadd.f32 %v1822, %v1934
      %1936 = vmatmul.f32.gmra.mxu0 %v824
      %v1937 = vpop.f32.mrf.mxu0
      %v1938 = vadd.f32 %v1825, %v1937
      %1939 = vmatmul.f32.gmra.mxu0 %v833
      %v1940 = vpop.f32.mrf.mxu0
      %v1941 = vadd.f32 %v1828, %v1940
      %1942 = vmatmul.f32.gmra.mxu0 %v842
      %v1943 = vpop.f32.mrf.mxu0
      %v1944 = vadd.f32 %v1831, %v1943
      %1945 = vmatmul.f32.gmra.mxu0 %v851
      %v1946 = vpop.f32.mrf.mxu0
      %v1947 = vadd.f32 %v1834, %v1946
      %1948 = vmatmul.f32.gmra.mxu0 %v860
      %v1949 = vpop.f32.mrf.mxu0
      %v1950 = vadd.f32 %v1837, %v1949
      %1951 = vmatmul.f32.gmra.mxu0 %v869
      %v1952 = vpop.f32.mrf.mxu0
      %v1953 = vadd.f32 %v1840, %v1952
      %1954 = vmatmul.f32.gmra.mxu0 %v878
      %v1955 = vpop.f32.mrf.mxu0
      %v1956 = vadd.f32 %v1843, %v1955
      %1957 = vmatmul.f32.gmra.mxu0 %v887
      %v1958 = vpop.f32.mrf.mxu0
      %v1959 = vadd.f32 %v1846, %v1958
      %1960 = vmatmul.f32.gmra.mxu0 %v896
      %v1961 = vpop.f32.mrf.mxu0
      %v1962 = vadd.f32 %v1849, %v1961
      %1963 = vmatmul.f32.gmra.mxu0 %v905
      %v1964 = vpop.f32.mrf.mxu0
      %v1965 = vadd.f32 %v1852, %v1964
      %1966 = vmatmul.f32.gmra.mxu0 %v914
      %v1967 = vpop.f32.mrf.mxu0
      %v1968 = vadd.f32 %v1855, %v1967
      %1969 = vmatmul.f32.gmra.mxu0 %v923
      %v1970 = vpop.f32.mrf.mxu0
      %v1971 = vadd.f32 %v1858, %v1970
      %1972 = vmatmul.f32.gmra.mxu0 %v932
      %v1973 = vpop.f32.mrf.mxu0
      %v1974 = vadd.f32 %v1861, %v1973
      %1975 = vmatmul.f32.gmra.mxu0 %v941
      %v1976 = vpop.f32.mrf.mxu0
      %v1977 = vadd.f32 %v1864, %v1976
      %1978 = vmatmul.f32.gmra.mxu0 %v950
      %v1979 = vpop.f32.mrf.mxu0
      %v1980 = vadd.f32 %v1867, %v1979
      %1981 = vmatmul.f32.gmra.mxu0 %v959
      %v1982 = vpop.f32.mrf.mxu0
      %v1983 = vadd.f32 %v1870, %v1982
      %1984 = vmatmul.f32.gmra.mxu0 %v968
      %v1985 = vpop.f32.mrf.mxu0
      %v1986 = vadd.f32 %v1873, %v1985
      %1987 = vmatmul.f32.gmra.mxu0 %v977
      %v1988 = vpop.f32.mrf.mxu0
      %v1989 = vadd.f32 %v1876, %v1988
      %1990 = vmatmul.f32.gmra.mxu0 %v986
      %v1991 = vpop.f32.mrf.mxu0
      %v1992 = vadd.f32 %v1879, %v1991
      %1993 = vmatmul.f32.gmra.mxu0 %v995
      %v1994 = vpop.f32.mrf.mxu0
      %v1995 = vadd.f32 %v1882, %v1994
      %1996 = vmatmul.f32.gmra.mxu0 %v1004
      %v1997 = vpop.f32.mrf.mxu0
      %v1998 = vadd.f32 %v1885, %v1997
      %1999 = vmatmul.f32.gmra.mxu0 %v1013
      %v2000 = vpop.f32.mrf.mxu0
      %v2001 = vadd.f32 %v1888, %v2000
      %2002 = vmatmul.f32.gmra.mxu0 %v1022
      %v2003 = vpop.f32.mrf.mxu0
      %v2004 = vadd.f32 %v1891, %v2003
      %2005 = vmatmul.f32.gmra.mxu0 %v1031
      %v2006 = vpop.f32.mrf.mxu0
      %v2007 = vadd.f32 %v1894, %v2006
      %2008 = vmatmul.f32.gmra.mxu0 %v1040
      %v2009 = vpop.f32.mrf.mxu0
      %v2010 = vadd.f32 %v1897, %v2009
      %2011 = vmatmul.f32.gmra.mxu0 %v1049
      %v2012 = vpop.f32.mrf.mxu0
      %v2013 = vadd.f32 %v1900, %v2012
      %2014 = vmatmul.f32.gmra.mxu0 %v1058
      %v2015 = vpop.f32.mrf.mxu0
      %v2016 = vadd.f32 %v1903, %v2015
      %2017 = vmatmul.f32.gmra.mxu0 %v1067
      %v2018 = vpop.f32.mrf.mxu0
      %v2019 = vadd.f32 %v1906, %v2018
      %2020 = vmatmul.f32.gmra.mxu0 %v1076
      %v2021 = vpop.f32.mrf.mxu0
      %v2022 = vadd.f32 %v1909, %v2021
      %2023 = vmatmul.f32.gmra.mxu0 %v1085
      %v2024 = vpop.f32.mrf.mxu0
      %v2025 = vadd.f32 %v1912, %v2024
      %2026 = vdwg.mxu0
      %2027 = vmatpush.msra.mxu0 %v1215
      %2028 = vmatpush.msra.mxu0 %v1214
      %2029 = vmatpush.msra.mxu0 %v1213
      %2030 = vmatpush.msra.mxu0 %v1212
      %2031 = vmatpush.msra.mxu0 %v1211
      %2032 = vmatpush.msra.mxu0 %v1210
      %2033 = vmatpush.msra.mxu0 %v1209
      %2034 = vmatpush.msra.mxu0 %v1208
      %2035 = vmatpush.msra.mxu0 %v1207
      %2036 = vmatpush.msra.mxu0 %v1206
      %2037 = vmatpush.msra.mxu0 %v1205
      %2038 = vmatpush.msra.mxu0 %v1204
      %2039 = vmatpush.msra.mxu0 %v1203
      %2040 = vmatpush.msra.mxu0 %v1202
      %2041 = vmatpush.msra.mxu0 %v1201
      %2042 = vmatpush.msra.mxu0 %v1200
      %2043 = vmatmul.f32.gmra.mxu0 %v807
      %v2044 = vpop.f32.mrf.mxu0
      %v2045 = vadd.f32 %v1932, %v2044
      %2046 = vmatmul.f32.gmra.mxu0 %v816
      %v2047 = vpop.f32.mrf.mxu0
      %v2048 = vadd.f32 %v1935, %v2047
      %2049 = vmatmul.f32.gmra.mxu0 %v825
      %v2050 = vpop.f32.mrf.mxu0
      %v2051 = vadd.f32 %v1938, %v2050
      %2052 = vmatmul.f32.gmra.mxu0 %v834
      %v2053 = vpop.f32.mrf.mxu0
      %v2054 = vadd.f32 %v1941, %v2053
      %2055 = vmatmul.f32.gmra.mxu0 %v843
      %v2056 = vpop.f32.mrf.mxu0
      %v2057 = vadd.f32 %v1944, %v2056
      %2058 = vmatmul.f32.gmra.mxu0 %v852
      %v2059 = vpop.f32.mrf.mxu0
      %v2060 = vadd.f32 %v1947, %v2059
      %2061 = vmatmul.f32.gmra.mxu0 %v861
      %v2062 = vpop.f32.mrf.mxu0
      %v2063 = vadd.f32 %v1950, %v2062
      %2064 = vmatmul.f32.gmra.mxu0 %v870
      %v2065 = vpop.f32.mrf.mxu0
      %v2066 = vadd.f32 %v1953, %v2065
      %2067 = vmatmul.f32.gmra.mxu0 %v879
      %v2068 = vpop.f32.mrf.mxu0
      %v2069 = vadd.f32 %v1956, %v2068
      %2070 = vmatmul.f32.gmra.mxu0 %v888
      %v2071 = vpop.f32.mrf.mxu0
      %v2072 = vadd.f32 %v1959, %v2071
      %2073 = vmatmul.f32.gmra.mxu0 %v897
      %v2074 = vpop.f32.mrf.mxu0
      %v2075 = vadd.f32 %v1962, %v2074
      %2076 = vmatmul.f32.gmra.mxu0 %v906
      %v2077 = vpop.f32.mrf.mxu0
      %v2078 = vadd.f32 %v1965, %v2077
      %2079 = vmatmul.f32.gmra.mxu0 %v915
      %v2080 = vpop.f32.mrf.mxu0
      %v2081 = vadd.f32 %v1968, %v2080
      %2082 = vmatmul.f32.gmra.mxu0 %v924
      %v2083 = vpop.f32.mrf.mxu0
      %v2084 = vadd.f32 %v1971, %v2083
      %2085 = vmatmul.f32.gmra.mxu0 %v933
      %v2086 = vpop.f32.mrf.mxu0
      %v2087 = vadd.f32 %v1974, %v2086
      %2088 = vmatmul.f32.gmra.mxu0 %v942
      %v2089 = vpop.f32.mrf.mxu0
      %v2090 = vadd.f32 %v1977, %v2089
      %2091 = vmatmul.f32.gmra.mxu0 %v951
      %v2092 = vpop.f32.mrf.mxu0
      %v2093 = vadd.f32 %v1980, %v2092
      %2094 = vmatmul.f32.gmra.mxu0 %v960
      %v2095 = vpop.f32.mrf.mxu0
      %v2096 = vadd.f32 %v1983, %v2095
      %2097 = vmatmul.f32.gmra.mxu0 %v969
      %v2098 = vpop.f32.mrf.mxu0
      %v2099 = vadd.f32 %v1986, %v2098
      %2100 = vmatmul.f32.gmra.mxu0 %v978
      %v2101 = vpop.f32.mrf.mxu0
      %v2102 = vadd.f32 %v1989, %v2101
      %2103 = vmatmul.f32.gmra.mxu0 %v987
      %v2104 = vpop.f32.mrf.mxu0
      %v2105 = vadd.f32 %v1992, %v2104
      %2106 = vmatmul.f32.gmra.mxu0 %v996
      %v2107 = vpop.f32.mrf.mxu0
      %v2108 = vadd.f32 %v1995, %v2107
      %2109 = vmatmul.f32.gmra.mxu0 %v1005
      %v2110 = vpop.f32.mrf.mxu0
      %v2111 = vadd.f32 %v1998, %v2110
      %2112 = vmatmul.f32.gmra.mxu0 %v1014
      %v2113 = vpop.f32.mrf.mxu0
      %v2114 = vadd.f32 %v2001, %v2113
      %2115 = vmatmul.f32.gmra.mxu0 %v1023
      %v2116 = vpop.f32.mrf.mxu0
      %v2117 = vadd.f32 %v2004, %v2116
      %2118 = vmatmul.f32.gmra.mxu0 %v1032
      %v2119 = vpop.f32.mrf.mxu0
      %v2120 = vadd.f32 %v2007, %v2119
      %2121 = vmatmul.f32.gmra.mxu0 %v1041
      %v2122 = vpop.f32.mrf.mxu0
      %v2123 = vadd.f32 %v2010, %v2122
      %2124 = vmatmul.f32.gmra.mxu0 %v1050
      %v2125 = vpop.f32.mrf.mxu0
      %v2126 = vadd.f32 %v2013, %v2125
      %2127 = vmatmul.f32.gmra.mxu0 %v1059
      %v2128 = vpop.f32.mrf.mxu0
      %v2129 = vadd.f32 %v2016, %v2128
      %2130 = vmatmul.f32.gmra.mxu0 %v1068
      %v2131 = vpop.f32.mrf.mxu0
      %v2132 = vadd.f32 %v2019, %v2131
      %2133 = vmatmul.f32.gmra.mxu0 %v1077
      %v2134 = vpop.f32.mrf.mxu0
      %v2135 = vadd.f32 %v2022, %v2134
      %2136 = vmatmul.f32.gmra.mxu0 %v1086
      %v2137 = vpop.f32.mrf.mxu0
      %v2138 = vadd.f32 %v2025, %v2137
      %2139 = vdwg.mxu0
      %2140 = vmatpush.msra.mxu0 %v1231
      %2141 = vmatpush.msra.mxu0 %v1230
      %2142 = vmatpush.msra.mxu0 %v1229
      %2143 = vmatpush.msra.mxu0 %v1228
      %2144 = vmatpush.msra.mxu0 %v1227
      %2145 = vmatpush.msra.mxu0 %v1226
      %2146 = vmatpush.msra.mxu0 %v1225
      %2147 = vmatpush.msra.mxu0 %v1224
      %2148 = vmatpush.msra.mxu0 %v1223
      %2149 = vmatpush.msra.mxu0 %v1222
      %2150 = vmatpush.msra.mxu0 %v1221
      %2151 = vmatpush.msra.mxu0 %v1220
      %2152 = vmatpush.msra.mxu0 %v1219
      %2153 = vmatpush.msra.mxu0 %v1218
      %2154 = vmatpush.msra.mxu0 %v1217
      %2155 = vmatpush.msra.mxu0 %v1216
      %2156 = vmatmul.f32.gmra.mxu0 %v808
      %v2157 = vpop.f32.mrf.mxu0
      %v2158 = vadd.f32 %v2045, %v2157
      %2159 = vmatmul.f32.gmra.mxu0 %v817
      %v2160 = vpop.f32.mrf.mxu0
      %v2161 = vadd.f32 %v2048, %v2160
      %2162 = vmatmul.f32.gmra.mxu0 %v826
      %v2163 = vpop.f32.mrf.mxu0
      %v2164 = vadd.f32 %v2051, %v2163
      %2165 = vmatmul.f32.gmra.mxu0 %v835
      %v2166 = vpop.f32.mrf.mxu0
      %v2167 = vadd.f32 %v2054, %v2166
      %2168 = vmatmul.f32.gmra.mxu0 %v844
      %v2169 = vpop.f32.mrf.mxu0
      %v2170 = vadd.f32 %v2057, %v2169
      %2171 = vmatmul.f32.gmra.mxu0 %v853
      %v2172 = vpop.f32.mrf.mxu0
      %v2173 = vadd.f32 %v2060, %v2172
      %2174 = vmatmul.f32.gmra.mxu0 %v862
      %v2175 = vpop.f32.mrf.mxu0
      %v2176 = vadd.f32 %v2063, %v2175
      %2177 = vmatmul.f32.gmra.mxu0 %v871
      %v2178 = vpop.f32.mrf.mxu0
      %v2179 = vadd.f32 %v2066, %v2178
      %2180 = vmatmul.f32.gmra.mxu0 %v880
      %v2181 = vpop.f32.mrf.mxu0
      %v2182 = vadd.f32 %v2069, %v2181
      %2183 = vmatmul.f32.gmra.mxu0 %v889
      %v2184 = vpop.f32.mrf.mxu0
      %v2185 = vadd.f32 %v2072, %v2184
      %2186 = vmatmul.f32.gmra.mxu0 %v898
      %v2187 = vpop.f32.mrf.mxu0
      %v2188 = vadd.f32 %v2075, %v2187
      %2189 = vmatmul.f32.gmra.mxu0 %v907
      %v2190 = vpop.f32.mrf.mxu0
      %v2191 = vadd.f32 %v2078, %v2190
      %2192 = vmatmul.f32.gmra.mxu0 %v916
      %v2193 = vpop.f32.mrf.mxu0
      %v2194 = vadd.f32 %v2081, %v2193
      %2195 = vmatmul.f32.gmra.mxu0 %v925
      %v2196 = vpop.f32.mrf.mxu0
      %v2197 = vadd.f32 %v2084, %v2196
      %2198 = vmatmul.f32.gmra.mxu0 %v934
      %v2199 = vpop.f32.mrf.mxu0
      %v2200 = vadd.f32 %v2087, %v2199
      %2201 = vmatmul.f32.gmra.mxu0 %v943
      %v2202 = vpop.f32.mrf.mxu0
      %v2203 = vadd.f32 %v2090, %v2202
      %2204 = vmatmul.f32.gmra.mxu0 %v952
      %v2205 = vpop.f32.mrf.mxu0
      %v2206 = vadd.f32 %v2093, %v2205
      %2207 = vmatmul.f32.gmra.mxu0 %v961
      %v2208 = vpop.f32.mrf.mxu0
      %v2209 = vadd.f32 %v2096, %v2208
      %2210 = vmatmul.f32.gmra.mxu0 %v970
      %v2211 = vpop.f32.mrf.mxu0
      %v2212 = vadd.f32 %v2099, %v2211
      %2213 = vmatmul.f32.gmra.mxu0 %v979
      %v2214 = vpop.f32.mrf.mxu0
      %v2215 = vadd.f32 %v2102, %v2214
      %2216 = vmatmul.f32.gmra.mxu0 %v988
      %v2217 = vpop.f32.mrf.mxu0
      %v2218 = vadd.f32 %v2105, %v2217
      %2219 = vmatmul.f32.gmra.mxu0 %v997
      %v2220 = vpop.f32.mrf.mxu0
      %v2221 = vadd.f32 %v2108, %v2220
      %2222 = vmatmul.f32.gmra.mxu0 %v1006
      %v2223 = vpop.f32.mrf.mxu0
      %v2224 = vadd.f32 %v2111, %v2223
      %2225 = vmatmul.f32.gmra.mxu0 %v1015
      %v2226 = vpop.f32.mrf.mxu0
      %v2227 = vadd.f32 %v2114, %v2226
      %2228 = vmatmul.f32.gmra.mxu0 %v1024
      %v2229 = vpop.f32.mrf.mxu0
      %v2230 = vadd.f32 %v2117, %v2229
      %2231 = vmatmul.f32.gmra.mxu0 %v1033
      %v2232 = vpop.f32.mrf.mxu0
      %v2233 = vadd.f32 %v2120, %v2232
      %2234 = vmatmul.f32.gmra.mxu0 %v1042
      %v2235 = vpop.f32.mrf.mxu0
      %v2236 = vadd.f32 %v2123, %v2235
      %2237 = vmatmul.f32.gmra.mxu0 %v1051
      %v2238 = vpop.f32.mrf.mxu0
      %v2239 = vadd.f32 %v2126, %v2238
      %2240 = vmatmul.f32.gmra.mxu0 %v1060
      %v2241 = vpop.f32.mrf.mxu0
      %v2242 = vadd.f32 %v2129, %v2241
      %2243 = vmatmul.f32.gmra.mxu0 %v1069
      %v2244 = vpop.f32.mrf.mxu0
      %v2245 = vadd.f32 %v2132, %v2244
      %2246 = vmatmul.f32.gmra.mxu0 %v1078
      %v2247 = vpop.f32.mrf.mxu0
      %v2248 = vadd.f32 %v2135, %v2247
      %2249 = vmatmul.f32.gmra.mxu0 %v1087
      %v2250 = vpop.f32.mrf.mxu0
      %v2251 = vadd.f32 %v2138, %v2250
      %2252 = vdwg.mxu0
      %2253 = vst [vmem:[%s221] sm:$0xff] %v2158
      %2254 = vst [vmem:[%s221 + $0x8] sm:$0xff] %v2161
      %2255 = vst [vmem:[%s221 + $0x10] sm:$0xff] %v2164
      %2256 = vst [vmem:[%s221 + $0x18] sm:$0xff] %v2167
      %2257 = vst [vmem:[%s221 + $0x20] sm:$0xff] %v2170
      %2258 = vst [vmem:[%s221 + $0x28] sm:$0xff] %v2173
      %2259 = vst [vmem:[%s221 + $0x30] sm:$0xff] %v2176
      %2260 = vst [vmem:[%s221 + $0x38] sm:$0xff] %v2179
      %2261 = vst [vmem:[%s221 + $0x40] sm:$0xff] %v2182
      %2262 = vst [vmem:[%s221 + $0x48] sm:$0xff] %v2185
      %2263 = vst [vmem:[%s221 + $0x50] sm:$0xff] %v2188
      %2264 = vst [vmem:[%s221 + $0x58] sm:$0xff] %v2191
      %2265 = vst [vmem:[%s221 + $0x60] sm:$0xff] %v2194
      %2266 = vst [vmem:[%s221 + $0x68] sm:$0xff] %v2197
      %2267 = vst [vmem:[%s221 + $0x70] sm:$0xff] %v2200
      %2268 = vst [vmem:[%s221 + $0x78] sm:$0xff] %v2203
      %2269 = vst [vmem:[%s221 + $0x80] sm:$0xff] %v2206
      %2270 = vst [vmem:[%s221 + $0x88] sm:$0xff] %v2209
      %2271 = vst [vmem:[%s221 + $0x90] sm:$0xff] %v2212
      %2272 = vst [vmem:[%s221 + $0x98] sm:$0xff] %v2215
      %2273 = vst [vmem:[%s221 + $0xa0] sm:$0xff] %v2218
      %2274 = vst [vmem:[%s221 + $0xa8] sm:$0xff] %v2221
      %2275 = vst [vmem:[%s221 + $0xb0] sm:$0xff] %v2224
      %2276 = vst [vmem:[%s221 + $0xb8] sm:$0xff] %v2227
      %2277 = vst [vmem:[%s221 + $0xc0] sm:$0xff] %v2230
      %2278 = vst [vmem:[%s221 + $0xc8] sm:$0xff] %v2233
      %2279 = vst [vmem:[%s221 + $0xd0] sm:$0xff] %v2236
      %2280 = vst [vmem:[%s221 + $0xd8] sm:$0xff] %v2239
      %2281 = vst [vmem:[%s221 + $0xe0] sm:$0xff] %v2242
      %2282 = vst [vmem:[%s221 + $0xe8] sm:$0xff] %v2245
      %2283 = vst [vmem:[%s221 + $0xf0] sm:$0xff] %v2248
      %2284 = vst [vmem:[%s221 + $0xf8] sm:$0xff] %v2251
      %p2285 = scmp.lt.s32.totalorder %s19, 1
      %s2286 = scalar_select %p2285, %s19, 1
      %p2287 = scmp.lt.s32.totalorder %s18, 0
      %s2288 = scalar_select %p2287, %s18, 0
      %s2289 = smul.addr %s2286, 32
      %s2290 = sadd.s32 %s2288, %s2289
      %s2291 = smul.addr %s2290, 8
      %s2292 = scalar_lea.vmem %s3, %s2291
      // Predicated region
      $region33: #{bayes_gaussion_conv2d_forward.3} parent=31 // pred_check
        %p2293 = pneg %p124
      $region34: #{bayes_gaussion_conv2d_forward.3} parent=31 // pred_check_branch
        %2295 = sbr.rel (%p2293) target = $region36
      $region35: #{bayes_gaussion_conv2d_forward.3} parent=31 // pred_region
        _
      $region36: #{bayes_gaussion_conv2d_forward.3} parent=31 // pred_fallthru
        _
    $region32: #{bayes_gaussion_conv2d_forward.3} parent=5 // pred_fallthru
      _
    %p2296 = scmp.le.s32.totalorder 2, %s9
    // Predicated region
    $region37: #{bayes_gaussion_conv2d_forward.3} parent=5 // pred_check
      %p2297 = pneg %p2296
    $region38: #{bayes_gaussion_conv2d_forward.3} parent=5 // pred_check_branch
      %2299 = sbr.rel (%p2297) target = $region40
    $region39: #{bayes_gaussion_conv2d_forward.3} parent=5 // pred_region
      %s2300 = ssub.s32 %s9, 2
      // Predicated region
      $region41: #{bayes_gaussion_conv2d_forward.3} parent=39 // pred_check
        %p2301 = pneg %p130
      $region42: #{bayes_gaussion_conv2d_forward.3} parent=39 // pred_check_branch
        %2303 = sbr.rel (%p2301) target = $region44
      $region43: #{bayes_gaussion_conv2d_forward.3} parent=39 // pred_region
        %p2304 = scmp.lt.s32.totalorder %s21, 1
        %s2305 = scalar_select %p2304, %s21, 1
        %p2306 = scmp.lt.s32.totalorder %s20, 0
        %s2307 = scalar_select %p2306, %s20, 0
        %s2308 = smul.addr %s2305, 32
        %s2309 = sadd.s32 %s2307, %s2308
        %s2310 = smul.addr %s2309, 8
        %s2311 = scalar_lea.vmem %s3, %s2310
      $region44: #{bayes_gaussion_conv2d_forward.3} parent=39 // pred_fallthru
        _
    $region40: #{bayes_gaussion_conv2d_forward.3} parent=5 // pred_fallthru
      _
  $region6: #{bayes_gaussion_conv2d_forward.3} parent=0 // loop_footer
    %s13 = sadd.s32 1, %s9
  $region7: #{bayes_gaussion_conv2d_forward.3} parent=0 // loop_footer_branch
    %8 = sbr.rel target = $region3
  $region8: #{bayes_gaussion_conv2d_forward.3} parent=0 // loop_exit
    _

</llo_original>
